<compile_context>
chip_gen: v6e
topology: v6e:2x2x1
jax: 0.10.0
libtpu: 0.0.40
codegen_flags: <defaults>
</compile_context>

<pallas_src>
import numpy as np
import jax
import jax.numpy as jnp
from jax.experimental import pallas as pl
from jax.experimental.pallas import tpu as pltpu


# ------------------------------ fused model kernel ------------------------------
def make_model_kernel(n_layers, seq_len, batch, batch_pad):
    """Build a fused kernel: n_layers of relu-RNN + final Linear, one invocation."""
    S, B, BP = seq_len, batch, batch_pad

    def kernel(*refs):
        # refs = [x, (w_in, w_hh, bias) * n_layers, w_fc, b_fc, out_ref, hid_ref, seq_scr]
        idx = 0
        x_ref = refs[idx]; idx += 1
        layers = []
        for _ in range(n_layers):
            layers.append((refs[idx], refs[idx + 1], refs[idx + 2]))
            idx += 3
        wfc_ref = refs[idx]; idx += 1
        bfc_ref = refs[idx]; idx += 1
        out_ref = refs[idx]; idx += 1
        hid_ref = refs[idx]; idx += 1
        seq_scr = refs[idx]; idx += 1                      # (S*BP, H) time-major, batch-padded

        H = seq_scr.shape[-1]
        D = x_ref.shape[-1]

        # ---------------- layer 0: hoisted input projection on the native input ----------------
        w_in0, w_hh0, b0 = layers[0]
        # (B, S, D) -> (B*S, D): stack the per-batch slabs (row b*S + t).  Pure sublane
        # stacking of already-tiled slabs; no wrapper-side transpose of x is needed.
        x2d = jnp.concatenate([x_ref[b] for b in range(B)], axis=0)
        pre_bm = (jnp.dot(x2d, w_in0[...], preferred_element_type=jnp.float32)
                  + b0[...])                               # (B*S, H), batch-major rows

        # One-off rearrangement to time-major, batch-padded (S*BP, H) so that every
        # per-step slice / store in the recurrence below is a full (8, H) sublane tile.
        parts = []
        if BP > B:
            zrow = jnp.zeros((BP - B, H), jnp.float32)
        for t in range(S):
            for b in range(B):
                r = b * S + t
                parts.append(pre_bm[r:r + 1, :])
            if BP > B:
                parts.append(zrow)
        pre = jnp.concatenate(parts, axis=0)               # (S*BP, H)

        def run_layer(pre, w_hh):
            """Serial recurrence for one layer; writes the layer output into seq_scr."""
            h = jnp.zeros((BP, H), jnp.float32)            # init_hidden: zeros
            for t in range(S):                             # static, fully unrolled (S small)
                h = jnp.maximum(
                    pre[t * BP:(t + 1) * BP, :]            # full-tile, aligned read
                    + jnp.dot(h, w_hh, preferred_element_type=jnp.float32),
                    0.0)                                   # nonlinearity='relu'
                seq_scr[t * BP:(t + 1) * BP, :] = h        # full-tile, aligned store
            return h

        h_last = run_layer(pre, w_hh0[...])
        hid_ref[0] = h_last[:B, :]                         # written once per layer

        # ---------------- layers 1 .. n_layers-1 ----------------
        for layer in range(1, n_layers):
            w_in, w_hh, b_l = layers[layer]
            # Whole-sequence input projection (padded rows carry harmless garbage that
            # never mixes into real rows: all ops are row-independent).
            pre = (jnp.dot(seq_scr[...], w_in[...], preferred_element_type=jnp.float32)
                   + b_l[...])                             # (S*BP, H)
            h_last = run_layer(pre, w_hh[...])
            hid_ref[layer] = h_last[:B, :]

        # ---------------- fused fc on the VMEM-resident last-layer sequence ----------------
        out_full = (jnp.dot(seq_scr[...], wfc_ref[...], preferred_element_type=jnp.float32)
                    + bfc_ref[...])                        # (S*BP, O), time-major padded
        # Write rows directly in batch-major order (row b*S + t), so the wrapper does no
        # post-processing: per batch element gather its S rows and do one aligned 8-row store.
        for b in range(B):
            rows = [out_full[t * BP + b:t * BP + b + 1, :] for t in range(S)]
            out_ref[b * S:(b + 1) * S, :] = jnp.concatenate(rows, axis=0)

    return kernel


# ------------------------------- wrapper -------------------------------
def prepare_params(params):
    """One-time weight preparation (do NOT call per forward):
    pre-transpose w_ih / w_hh / w_fc, fuse b_ih + b_hh, reshape biases to rows."""
    rnn_prepared = []
    for (w_ih, w_hh, b_ih, b_hh) in params["rnn"]:
        rnn_prepared.append((jnp.transpose(w_ih),              # (in_dim, H)
                             jnp.transpose(w_hh),              # (H, H)
                             (b_ih + b_hh).reshape(1, -1)))    # (1, H) fused bias row
    w_fc, b_fc = params["fc"]
    return {"rnn": rnn_prepared,
            "fc": (jnp.transpose(w_fc), b_fc.reshape(1, -1))}  # (H, O), (1, O)


@jax.jit
def forward(prepared, x):
    """x: (batch, seq, input_size), batch_first like the PyTorch module.

    Returns (out, hidden) with out: (batch*seq, output_size) and
    hidden: (n_layers, batch, hidden_dim) — matching FirstSimpleModel.forward.
    The whole forward is a single fused pallas_call; no per-call array prep.
    """
    B, S, _ = x.shape
    rnn = prepared["rnn"]
    n_layers = len(rnn)
    H = rnn[0][0].shape[1]
    w_fc, b_fc = prepared["fc"]
    O = w_fc.shape[1]
    BP = max(8, -(-B // 8) * 8)          # pad batch to a full f32 sublane tile

    args = [x]
    for layer_params in rnn:
        args.extend(layer_params)
    args.extend([w_fc, b_fc])

    out, hidden = pl.pallas_call(
        make_model_kernel(n_layers, S, B, BP),
        out_shape=(jax.ShapeDtypeStruct((B * S, O), jnp.float32),
                   jax.ShapeDtypeStruct((n_layers, B, H), jnp.float32)),
        scratch_shapes=[pltpu.VMEM((S * BP, H), jnp.float32)],
    )(*args)
    return out, hidden


# ------------------------------- params / reference -------------------------------
def init_params(key, input_size, hidden_dim, output_size, n_layers):
    """Deterministic PyTorch-style init: U(-1/sqrt(H), 1/sqrt(H))."""
    k = 1.0 / np.sqrt(hidden_dim)
    keys = jax.random.split(key, n_layers * 4 + 2)
    idx = 0
    rnn = []
    for layer in range(n_layers):
        in_dim = input_size if layer == 0 else hidden_dim
        w_ih = jax.random.uniform(keys[idx], (hidden_dim, in_dim), jnp.float32, -k, k); idx += 1
        w_hh = jax.random.uniform(keys[idx], (hidden_dim, hidden_dim), jnp.float32, -k, k); idx += 1
        b_ih = jax.random.uniform(keys[idx], (hidden_dim,), jnp.float32, -k, k); idx += 1
        b_hh = jax.random.uniform(keys[idx], (hidden_dim,), jnp.float32, -k, k); idx += 1
        rnn.append((w_ih, w_hh, b_ih, b_hh))
    w_fc = jax.random.uniform(keys[idx], (output_size, hidden_dim), jnp.float32, -k, k); idx += 1
    b_fc = jax.random.uniform(keys[idx], (output_size,), jnp.float32, -k, k)
    return {"rnn": rnn, "fc": (w_fc, b_fc)}


def forward_ref(params, x):
    """Pure-JAX reference of the PyTorch forward, for a correctness check."""
    B, S, _ = x.shape
    layer_in = x
    h_lasts = []
    for (w_ih, w_hh, b_ih, b_hh) in params["rnn"]:
        H = w_ih.shape[0]
        h = jnp.zeros((B, H), jnp.float32)
        outs = []
        for t in range(S):
            h = jnp.maximum(layer_in[:, t, :] @ w_ih.T + b_ih + h @ w_hh.T + b_hh, 0.0)
            outs.append(h)
        layer_in = jnp.stack(outs, axis=1)
        h_lasts.append(h)
    w_fc, b_fc = params["fc"]
    out = layer_in.reshape(B * S, -1) @ w_fc.T + b_fc
    return out, jnp.stack(h_lasts, axis=0)


if __name__ == "__main__":
    batch, seq, input_size, hidden_dim, output_size, n_layers = 2, 8, 16, 32, 4, 2

    key = jax.random.PRNGKey(0)
    k_params, k_x = jax.random.split(key)
    params = init_params(k_params, input_size, hidden_dim, output_size, n_layers)
    x = jax.random.normal(k_x, (batch, seq, input_size), jnp.float32)

    # One-time weight prep (transposes / bias fusion), outside the per-call path.
    prepared = jax.tree_util.tree_map(jax.block_until_ready, prepare_params(params))

    out, hidden = forward(prepared, x)
    out = jax.block_until_ready(out)
    hidden = jax.block_until_ready(hidden)

    out_ref, hidden_ref = forward_ref(params, x)
    assert out.shape == (batch * seq, output_size)
    assert hidden.shape == (n_layers, batch, hidden_dim)
    np.testing.assert_allclose(np.asarray(out), np.asarray(out_ref), rtol=1e-5, atol=1e-5)
    np.testing.assert_allclose(np.asarray(hidden), np.asarray(hidden_ref), rtol=1e-5, atol=1e-5)

    print("KERNEL_OK")
</pallas_src>

<mosaic_0001>
module attributes {stable_mosaic.version = 11 : i64} {
  func.func @kernel(%arg0: memref<2x8x16xf32, #tpu.memory_space<vmem>>, %arg1: memref<16x32xf32, #tpu.memory_space<vmem>>, %arg2: memref<32x32xf32, #tpu.memory_space<vmem>>, %arg3: memref<1x32xf32, #tpu.memory_space<vmem>>, %arg4: memref<32x32xf32, #tpu.memory_space<vmem>>, %arg5: memref<32x32xf32, #tpu.memory_space<vmem>>, %arg6: memref<1x32xf32, #tpu.memory_space<vmem>>, %arg7: memref<32x4xf32, #tpu.memory_space<vmem>>, %arg8: memref<1x4xf32, #tpu.memory_space<vmem>>, %arg9: memref<16x4xf32, #tpu.memory_space<vmem>>, %arg10: memref<2x2x32xf32, #tpu.memory_space<vmem>>, %arg11: memref<64x32xf32, #tpu.memory_space<vmem>>) attributes {dimension_semantics = [], scalar_prefetch = 0 : i64, scratch_operands = 1 : i64, tpu.core_type = #tpu.core_type<tc>} {
    %c0 = arith.constant 0 : index
    %c0_0 = arith.constant 0 : index
    %c0_1 = arith.constant 0 : index
    %0 = vector.load %arg0[%c0, %c0_0, %c0_1] : memref<2x8x16xf32, #tpu.memory_space<vmem>>, vector<1x8x16xf32>
    %1 = vector.shape_cast %0 : vector<1x8x16xf32> to vector<8x16xf32>
    %c1 = arith.constant 1 : index
    %c0_2 = arith.constant 0 : index
    %c0_3 = arith.constant 0 : index
    %2 = vector.load %arg0[%c1, %c0_2, %c0_3] : memref<2x8x16xf32, #tpu.memory_space<vmem>>, vector<1x8x16xf32>
    %3 = vector.shape_cast %2 : vector<1x8x16xf32> to vector<8x16xf32>
    %4 = tpu.concatenate %1, %3 in 0 : vector<8x16xf32>, vector<8x16xf32> -> vector<16x16xf32>
    %c0_4 = arith.constant 0 : index
    %c0_5 = arith.constant 0 : index
    %5 = vector.load %arg1[%c0_4, %c0_5] : memref<16x32xf32, #tpu.memory_space<vmem>>, vector<16x32xf32>
    %cst = arith.constant dense<0.000000e+00> : vector<16x32xf32>
    %6 = tpu.matmul %4, %5, %cst {dimension_numbers = #tpu.dot_dimension_numbers<[1], [0], [0], [1], [0, 0, 1, 1], [], []>} : vector<16x16xf32>, vector<16x32xf32>, vector<16x32xf32> -> vector<16x32xf32>
    %c0_6 = arith.constant 0 : index
    %c0_7 = arith.constant 0 : index
    %7 = vector.load %arg3[%c0_6, %c0_7] : memref<1x32xf32, #tpu.memory_space<vmem>>, vector<1x32xf32>
    %8 = vector.broadcast %7 : vector<1x32xf32> to vector<16x32xf32>
    %9 = arith.addf %6, %8 : vector<16x32xf32>
    %cst_8 = arith.constant 0.000000e+00 : f32
    %10 = vector.broadcast %cst_8 : f32 to vector<6x32xf32>
    %11 = vector.extract_strided_slice %9 {offsets = [0, 0], sizes = [1, 32], strides = [1, 1]} : vector<16x32xf32> to vector<1x32xf32>
    %12 = vector.extract_strided_slice %9 {offsets = [8, 0], sizes = [1, 32], strides = [1, 1]} : vector<16x32xf32> to vector<1x32xf32>
    %13 = vector.extract_strided_slice %9 {offsets = [1, 0], sizes = [1, 32], strides = [1, 1]} : vector<16x32xf32> to vector<1x32xf32>
    %14 = vector.extract_strided_slice %9 {offsets = [9, 0], sizes = [1, 32], strides = [1, 1]} : vector<16x32xf32> to vector<1x32xf32>
    %15 = vector.extract_strided_slice %9 {offsets = [2, 0], sizes = [1, 32], strides = [1, 1]} : vector<16x32xf32> to vector<1x32xf32>
    %16 = vector.extract_strided_slice %9 {offsets = [10, 0], sizes = [1, 32], strides = [1, 1]} : vector<16x32xf32> to vector<1x32xf32>
    %17 = vector.extract_strided_slice %9 {offsets = [3, 0], sizes = [1, 32], strides = [1, 1]} : vector<16x32xf32> to vector<1x32xf32>
    %18 = vector.extract_strided_slice %9 {offsets = [11, 0], sizes = [1, 32], strides = [1, 1]} : vector<16x32xf32> to vector<1x32xf32>
    %19 = vector.extract_strided_slice %9 {offsets = [4, 0], sizes = [1, 32], strides = [1, 1]} : vector<16x32xf32> to vector<1x32xf32>
    %20 = vector.extract_strided_slice %9 {offsets = [12, 0], sizes = [1, 32], strides = [1, 1]} : vector<16x32xf32> to vector<1x32xf32>
    %21 = vector.extract_strided_slice %9 {offsets = [5, 0], sizes = [1, 32], strides = [1, 1]} : vector<16x32xf32> to vector<1x32xf32>
    %22 = vector.extract_strided_slice %9 {offsets = [13, 0], sizes = [1, 32], strides = [1, 1]} : vector<16x32xf32> to vector<1x32xf32>
    %23 = vector.extract_strided_slice %9 {offsets = [6, 0], sizes = [1, 32], strides = [1, 1]} : vector<16x32xf32> to vector<1x32xf32>
    %24 = vector.extract_strided_slice %9 {offsets = [14, 0], sizes = [1, 32], strides = [1, 1]} : vector<16x32xf32> to vector<1x32xf32>
    %25 = vector.extract_strided_slice %9 {offsets = [7, 0], sizes = [1, 32], strides = [1, 1]} : vector<16x32xf32> to vector<1x32xf32>
    %26 = vector.extract_strided_slice %9 {offsets = [15, 0], sizes = [1, 32], strides = [1, 1]} : vector<16x32xf32> to vector<1x32xf32>
    %27 = tpu.concatenate %11, %12, %10, %13, %14, %10, %15, %16, %10, %17, %18, %10, %19, %20, %10, %21 in 0 : vector<1x32xf32>, vector<1x32xf32>, vector<6x32xf32>, vector<1x32xf32>, vector<1x32xf32>, vector<6x32xf32>, vector<1x32xf32>, vector<1x32xf32>, vector<6x32xf32>, vector<1x32xf32>, vector<1x32xf32>, vector<6x32xf32>, vector<1x32xf32>, vector<1x32xf32>, vector<6x32xf32>, vector<1x32xf32> -> vector<41x32xf32>
    %28 = tpu.concatenate %22, %10, %23, %24, %10, %25, %26, %10 in 0 : vector<1x32xf32>, vector<6x32xf32>, vector<1x32xf32>, vector<1x32xf32>, vector<6x32xf32>, vector<1x32xf32>, vector<1x32xf32>, vector<6x32xf32> -> vector<23x32xf32>
    %29 = tpu.concatenate %27, %28 in 0 : vector<41x32xf32>, vector<23x32xf32> -> vector<64x32xf32>
    %c0_9 = arith.constant 0 : index
    %c0_10 = arith.constant 0 : index
    %30 = vector.load %arg2[%c0_9, %c0_10] : memref<32x32xf32, #tpu.memory_space<vmem>>, vector<32x32xf32>
    %cst_11 = arith.constant 0.000000e+00 : f32
    %31 = vector.broadcast %cst_11 : f32 to vector<8x32xf32>
    %32 = vector.extract_strided_slice %29 {offsets = [0, 0], sizes = [8, 32], strides = [1, 1]} : vector<64x32xf32> to vector<8x32xf32>
    %cst_12 = arith.constant dense<0.000000e+00> : vector<8x32xf32>
    %33 = tpu.matmul %31, %30, %cst_12 {dimension_numbers = #tpu.dot_dimension_numbers<[1], [0], [0], [1], [0, 0, 1, 1], [], []>} : vector<8x32xf32>, vector<32x32xf32>, vector<8x32xf32> -> vector<8x32xf32>
    %34 = arith.addf %32, %33 : vector<8x32xf32>
    %cst_13 = arith.constant 0.000000e+00 : f32
    %35 = vector.broadcast %cst_13 : f32 to vector<8x32xf32>
    %36 = arith.maximumf %34, %35 : vector<8x32xf32>
    %c0_14 = arith.constant 0 : index
    %c0_15 = arith.constant 0 : index
    %37 = vector.load %arg11[%c0_14, %c0_15] : memref<64x32xf32, #tpu.memory_space<vmem>>, vector<8x32xf32>
    tpu.vector_store %arg11[%c0_14, %c0_15], %36 {strides = array<i32>} : memref<64x32xf32, #tpu.memory_space<vmem>>, vector<8x32xf32>,
    %38 = vector.extract_strided_slice %29 {offsets = [8, 0], sizes = [8, 32], strides = [1, 1]} : vector<64x32xf32> to vector<8x32xf32>
    %cst_16 = arith.constant dense<0.000000e+00> : vector<8x32xf32>
    %39 = tpu.matmul %36, %30, %cst_16 {dimension_numbers = #tpu.dot_dimension_numbers<[1], [0], [0], [1], [0, 0, 1, 1], [], []>} : vector<8x32xf32>, vector<32x32xf32>, vector<8x32xf32> -> vector<8x32xf32>
    %40 = arith.addf %38, %39 : vector<8x32xf32>
    %cst_17 = arith.constant 0.000000e+00 : f32
    %41 = vector.broadcast %cst_17 : f32 to vector<8x32xf32>
    %42 = arith.maximumf %40, %41 : vector<8x32xf32>
    %c8 = arith.constant 8 : index
    %c0_18 = arith.constant 0 : index
    %43 = vector.load %arg11[%c8, %c0_18] : memref<64x32xf32, #tpu.memory_space<vmem>>, vector<8x32xf32>
    tpu.vector_store %arg11[%c8, %c0_18], %42 {strides = array<i32>} : memref<64x32xf32, #tpu.memory_space<vmem>>, vector<8x32xf32>,
    %44 = vector.extract_strided_slice %29 {offsets = [16, 0], sizes = [8, 32], strides = [1, 1]} : vector<64x32xf32> to vector<8x32xf32>
    %cst_19 = arith.constant dense<0.000000e+00> : vector<8x32xf32>
    %45 = tpu.matmul %42, %30, %cst_19 {dimension_numbers = #tpu.dot_dimension_numbers<[1], [0], [0], [1], [0, 0, 1, 1], [], []>} : vector<8x32xf32>, vector<32x32xf32>, vector<8x32xf32> -> vector<8x32xf32>
    %46 = arith.addf %44, %45 : vector<8x32xf32>
    %cst_20 = arith.constant 0.000000e+00 : f32
    %47 = vector.broadcast %cst_20 : f32 to vector<8x32xf32>
    %48 = arith.maximumf %46, %47 : vector<8x32xf32>
    %c16 = arith.constant 16 : index
    %c0_21 = arith.constant 0 : index
    %49 = vector.load %arg11[%c16, %c0_21] : memref<64x32xf32, #tpu.memory_space<vmem>>, vector<8x32xf32>
    tpu.vector_store %arg11[%c16, %c0_21], %48 {strides = array<i32>} : memref<64x32xf32, #tpu.memory_space<vmem>>, vector<8x32xf32>,
    %50 = vector.extract_strided_slice %29 {offsets = [24, 0], sizes = [8, 32], strides = [1, 1]} : vector<64x32xf32> to vector<8x32xf32>
    %cst_22 = arith.constant dense<0.000000e+00> : vector<8x32xf32>
    %51 = tpu.matmul %48, %30, %cst_22 {dimension_numbers = #tpu.dot_dimension_numbers<[1], [0], [0], [1], [0, 0, 1, 1], [], []>} : vector<8x32xf32>, vector<32x32xf32>, vector<8x32xf32> -> vector<8x32xf32>
    %52 = arith.addf %50, %51 : vector<8x32xf32>
    %cst_23 = arith.constant 0.000000e+00 : f32
    %53 = vector.broadcast %cst_23 : f32 to vector<8x32xf32>
    %54 = arith.maximumf %52, %53 : vector<8x32xf32>
    %c24 = arith.constant 24 : index
    %c0_24 = arith.constant 0 : index
    %55 = vector.load %arg11[%c24, %c0_24] : memref<64x32xf32, #tpu.memory_space<vmem>>, vector<8x32xf32>
    tpu.vector_store %arg11[%c24, %c0_24], %54 {strides = array<i32>} : memref<64x32xf32, #tpu.memory_space<vmem>>, vector<8x32xf32>,
    %56 = vector.extract_strided_slice %29 {offsets = [32, 0], sizes = [8, 32], strides = [1, 1]} : vector<64x32xf32> to vector<8x32xf32>
    %cst_25 = arith.constant dense<0.000000e+00> : vector<8x32xf32>
    %57 = tpu.matmul %54, %30, %cst_25 {dimension_numbers = #tpu.dot_dimension_numbers<[1], [0], [0], [1], [0, 0, 1, 1], [], []>} : vector<8x32xf32>, vector<32x32xf32>, vector<8x32xf32> -> vector<8x32xf32>
    %58 = arith.addf %56, %57 : vector<8x32xf32>
    %cst_26 = arith.constant 0.000000e+00 : f32
    %59 = vector.broadcast %cst_26 : f32 to vector<8x32xf32>
    %60 = arith.maximumf %58, %59 : vector<8x32xf32>
    %c32 = arith.constant 32 : index
    %c0_27 = arith.constant 0 : index
    %61 = vector.load %arg11[%c32, %c0_27] : memref<64x32xf32, #tpu.memory_space<vmem>>, vector<8x32xf32>
    tpu.vector_store %arg11[%c32, %c0_27], %60 {strides = array<i32>} : memref<64x32xf32, #tpu.memory_space<vmem>>, vector<8x32xf32>,
    %62 = vector.extract_strided_slice %29 {offsets = [40, 0], sizes = [8, 32], strides = [1, 1]} : vector<64x32xf32> to vector<8x32xf32>
    %cst_28 = arith.constant dense<0.000000e+00> : vector<8x32xf32>
    %63 = tpu.matmul %60, %30, %cst_28 {dimension_numbers = #tpu.dot_dimension_numbers<[1], [0], [0], [1], [0, 0, 1, 1], [], []>} : vector<8x32xf32>, vector<32x32xf32>, vector<8x32xf32> -> vector<8x32xf32>
    %64 = arith.addf %62, %63 : vector<8x32xf32>
    %cst_29 = arith.constant 0.000000e+00 : f32
    %65 = vector.broadcast %cst_29 : f32 to vector<8x32xf32>
    %66 = arith.maximumf %64, %65 : vector<8x32xf32>
    %c40 = arith.constant 40 : index
    %c0_30 = arith.constant 0 : index
    %67 = vector.load %arg11[%c40, %c0_30] : memref<64x32xf32, #tpu.memory_space<vmem>>, vector<8x32xf32>
    tpu.vector_store %arg11[%c40, %c0_30], %66 {strides = array<i32>} : memref<64x32xf32, #tpu.memory_space<vmem>>, vector<8x32xf32>,
    %68 = vector.extract_strided_slice %29 {offsets = [48, 0], sizes = [8, 32], strides = [1, 1]} : vector<64x32xf32> to vector<8x32xf32>
    %cst_31 = arith.constant dense<0.000000e+00> : vector<8x32xf32>
    %69 = tpu.matmul %66, %30, %cst_31 {dimension_numbers = #tpu.dot_dimension_numbers<[1], [0], [0], [1], [0, 0, 1, 1], [], []>} : vector<8x32xf32>, vector<32x32xf32>, vector<8x32xf32> -> vector<8x32xf32>
    %70 = arith.addf %68, %69 : vector<8x32xf32>
    %cst_32 = arith.constant 0.000000e+00 : f32
    %71 = vector.broadcast %cst_32 : f32 to vector<8x32xf32>
    %72 = arith.maximumf %70, %71 : vector<8x32xf32>
    %c48 = arith.constant 48 : index
    %c0_33 = arith.constant 0 : index
    %73 = vector.load %arg11[%c48, %c0_33] : memref<64x32xf32, #tpu.memory_space<vmem>>, vector<8x32xf32>
    tpu.vector_store %arg11[%c48, %c0_33], %72 {strides = array<i32>} : memref<64x32xf32, #tpu.memory_space<vmem>>, vector<8x32xf32>,
    %74 = vector.extract_strided_slice %29 {offsets = [56, 0], sizes = [8, 32], strides = [1, 1]} : vector<64x32xf32> to vector<8x32xf32>
    %cst_34 = arith.constant dense<0.000000e+00> : vector<8x32xf32>
    %75 = tpu.matmul %72, %30, %cst_34 {dimension_numbers = #tpu.dot_dimension_numbers<[1], [0], [0], [1], [0, 0, 1, 1], [], []>} : vector<8x32xf32>, vector<32x32xf32>, vector<8x32xf32> -> vector<8x32xf32>
    %76 = arith.addf %74, %75 : vector<8x32xf32>
    %cst_35 = arith.constant 0.000000e+00 : f32
    %77 = vector.broadcast %cst_35 : f32 to vector<8x32xf32>
    %78 = arith.maximumf %76, %77 : vector<8x32xf32>
    %c56 = arith.constant 56 : index
    %c0_36 = arith.constant 0 : index
    %79 = vector.load %arg11[%c56, %c0_36] : memref<64x32xf32, #tpu.memory_space<vmem>>, vector<8x32xf32>
    tpu.vector_store %arg11[%c56, %c0_36], %78 {strides = array<i32>} : memref<64x32xf32, #tpu.memory_space<vmem>>, vector<8x32xf32>,
    %80 = vector.extract_strided_slice %78 {offsets = [0, 0], sizes = [2, 32], strides = [1, 1]} : vector<8x32xf32> to vector<2x32xf32>
    %c0_37 = arith.constant 0 : index
    %c0_38 = arith.constant 0 : index
    %c0_39 = arith.constant 0 : index
    %81 = vector.load %arg10[%c0_37, %c0_38, %c0_39] : memref<2x2x32xf32, #tpu.memory_space<vmem>>, vector<1x2x32xf32>
    %82 = vector.shape_cast %81 : vector<1x2x32xf32> to vector<2x32xf32>
    %83 = vector.shape_cast %80 : vector<2x32xf32> to vector<1x2x32xf32>
    tpu.vector_store %arg10[%c0_37, %c0_38, %c0_39], %83 {strides = array<i32>} : memref<2x2x32xf32, #tpu.memory_space<vmem>>, vector<1x2x32xf32>,
    %c0_40 = arith.constant 0 : index
    %c0_41 = arith.constant 0 : index
    %84 = vector.load %arg11[%c0_40, %c0_41] : memref<64x32xf32, #tpu.memory_space<vmem>>, vector<64x32xf32>
    %c0_42 = arith.constant 0 : index
    %c0_43 = arith.constant 0 : index
    %85 = vector.load %arg4[%c0_42, %c0_43] : memref<32x32xf32, #tpu.memory_space<vmem>>, vector<32x32xf32>
    %cst_44 = arith.constant dense<0.000000e+00> : vector<64x32xf32>
    %86 = tpu.matmul %84, %85, %cst_44 {dimension_numbers = #tpu.dot_dimension_numbers<[1], [0], [0], [1], [0, 0, 1, 1], [], []>} : vector<64x32xf32>, vector<32x32xf32>, vector<64x32xf32> -> vector<64x32xf32>
    %c0_45 = arith.constant 0 : index
    %c0_46 = arith.constant 0 : index
    %87 = vector.load %arg6[%c0_45, %c0_46] : memref<1x32xf32, #tpu.memory_space<vmem>>, vector<1x32xf32>
    %88 = vector.broadcast %87 : vector<1x32xf32> to vector<64x32xf32>
    %89 = arith.addf %86, %88 : vector<64x32xf32>
    %c0_47 = arith.constant 0 : index
    %c0_48 = arith.constant 0 : index
    %90 = vector.load %arg5[%c0_47, %c0_48] : memref<32x32xf32, #tpu.memory_space<vmem>>, vector<32x32xf32>
    %cst_49 = arith.constant 0.000000e+00 : f32
    %91 = vector.broadcast %cst_49 : f32 to vector<8x32xf32>
    %92 = vector.extract_strided_slice %89 {offsets = [0, 0], sizes = [8, 32], strides = [1, 1]} : vector<64x32xf32> to vector<8x32xf32>
    %cst_50 = arith.constant dense<0.000000e+00> : vector<8x32xf32>
    %93 = tpu.matmul %91, %90, %cst_50 {dimension_numbers = #tpu.dot_dimension_numbers<[1], [0], [0], [1], [0, 0, 1, 1], [], []>} : vector<8x32xf32>, vector<32x32xf32>, vector<8x32xf32> -> vector<8x32xf32>
    %94 = arith.addf %92, %93 : vector<8x32xf32>
    %cst_51 = arith.constant 0.000000e+00 : f32
    %95 = vector.broadcast %cst_51 : f32 to vector<8x32xf32>
    %96 = arith.maximumf %94, %95 : vector<8x32xf32>
    %c0_52 = arith.constant 0 : index
    %c0_53 = arith.constant 0 : index
    %97 = vector.load %arg11[%c0_52, %c0_53] : memref<64x32xf32, #tpu.memory_space<vmem>>, vector<8x32xf32>
    tpu.vector_store %arg11[%c0_52, %c0_53], %96 {strides = array<i32>} : memref<64x32xf32, #tpu.memory_space<vmem>>, vector<8x32xf32>,
    %98 = vector.extract_strided_slice %89 {offsets = [8, 0], sizes = [8, 32], strides = [1, 1]} : vector<64x32xf32> to vector<8x32xf32>
    %cst_54 = arith.constant dense<0.000000e+00> : vector<8x32xf32>
    %99 = tpu.matmul %96, %90, %cst_54 {dimension_numbers = #tpu.dot_dimension_numbers<[1], [0], [0], [1], [0, 0, 1, 1], [], []>} : vector<8x32xf32>, vector<32x32xf32>, vector<8x32xf32> -> vector<8x32xf32>
    %100 = arith.addf %98, %99 : vector<8x32xf32>
    %cst_55 = arith.constant 0.000000e+00 : f32
    %101 = vector.broadcast %cst_55 : f32 to vector<8x32xf32>
    %102 = arith.maximumf %100, %101 : vector<8x32xf32>
    %c8_56 = arith.constant 8 : index
    %c0_57 = arith.constant 0 : index
    %103 = vector.load %arg11[%c8_56, %c0_57] : memref<64x32xf32, #tpu.memory_space<vmem>>, vector<8x32xf32>
    tpu.vector_store %arg11[%c8_56, %c0_57], %102 {strides = array<i32>} : memref<64x32xf32, #tpu.memory_space<vmem>>, vector<8x32xf32>,
    %104 = vector.extract_strided_slice %89 {offsets = [16, 0], sizes = [8, 32], strides = [1, 1]} : vector<64x32xf32> to vector<8x32xf32>
    %cst_58 = arith.constant dense<0.000000e+00> : vector<8x32xf32>
    %105 = tpu.matmul %102, %90, %cst_58 {dimension_numbers = #tpu.dot_dimension_numbers<[1], [0], [0], [1], [0, 0, 1, 1], [], []>} : vector<8x32xf32>, vector<32x32xf32>, vector<8x32xf32> -> vector<8x32xf32>
    %106 = arith.addf %104, %105 : vector<8x32xf32>
    %cst_59 = arith.constant 0.000000e+00 : f32
    %107 = vector.broadcast %cst_59 : f32 to vector<8x32xf32>
    %108 = arith.maximumf %106, %107 : vector<8x32xf32>
    %c16_60 = arith.constant 16 : index
    %c0_61 = arith.constant 0 : index
    %109 = vector.load %arg11[%c16_60, %c0_61] : memref<64x32xf32, #tpu.memory_space<vmem>>, vector<8x32xf32>
    tpu.vector_store %arg11[%c16_60, %c0_61], %108 {strides = array<i32>} : memref<64x32xf32, #tpu.memory_space<vmem>>, vector<8x32xf32>,
    %110 = vector.extract_strided_slice %89 {offsets = [24, 0], sizes = [8, 32], strides = [1, 1]} : vector<64x32xf32> to vector<8x32xf32>
    %cst_62 = arith.constant dense<0.000000e+00> : vector<8x32xf32>
    %111 = tpu.matmul %108, %90, %cst_62 {dimension_numbers = #tpu.dot_dimension_numbers<[1], [0], [0], [1], [0, 0, 1, 1], [], []>} : vector<8x32xf32>, vector<32x32xf32>, vector<8x32xf32> -> vector<8x32xf32>
    %112 = arith.addf %110, %111 : vector<8x32xf32>
    %cst_63 = arith.constant 0.000000e+00 : f32
    %113 = vector.broadcast %cst_63 : f32 to vector<8x32xf32>
    %114 = arith.maximumf %112, %113 : vector<8x32xf32>
    %c24_64 = arith.constant 24 : index
    %c0_65 = arith.constant 0 : index
    %115 = vector.load %arg11[%c24_64, %c0_65] : memref<64x32xf32, #tpu.memory_space<vmem>>, vector<8x32xf32>
    tpu.vector_store %arg11[%c24_64, %c0_65], %114 {strides = array<i32>} : memref<64x32xf32, #tpu.memory_space<vmem>>, vector<8x32xf32>,
    %116 = vector.extract_strided_slice %89 {offsets = [32, 0], sizes = [8, 32], strides = [1, 1]} : vector<64x32xf32> to vector<8x32xf32>
    %cst_66 = arith.constant dense<0.000000e+00> : vector<8x32xf32>
    %117 = tpu.matmul %114, %90, %cst_66 {dimension_numbers = #tpu.dot_dimension_numbers<[1], [0], [0], [1], [0, 0, 1, 1], [], []>} : vector<8x32xf32>, vector<32x32xf32>, vector<8x32xf32> -> vector<8x32xf32>
    %118 = arith.addf %116, %117 : vector<8x32xf32>
    %cst_67 = arith.constant 0.000000e+00 : f32
    %119 = vector.broadcast %cst_67 : f32 to vector<8x32xf32>
    %120 = arith.maximumf %118, %119 : vector<8x32xf32>
    %c32_68 = arith.constant 32 : index
    %c0_69 = arith.constant 0 : index
    %121 = vector.load %arg11[%c32_68, %c0_69] : memref<64x32xf32, #tpu.memory_space<vmem>>, vector<8x32xf32>
    tpu.vector_store %arg11[%c32_68, %c0_69], %120 {strides = array<i32>} : memref<64x32xf32, #tpu.memory_space<vmem>>, vector<8x32xf32>,
    %122 = vector.extract_strided_slice %89 {offsets = [40, 0], sizes = [8, 32], strides = [1, 1]} : vector<64x32xf32> to vector<8x32xf32>
    %cst_70 = arith.constant dense<0.000000e+00> : vector<8x32xf32>
    %123 = tpu.matmul %120, %90, %cst_70 {dimension_numbers = #tpu.dot_dimension_numbers<[1], [0], [0], [1], [0, 0, 1, 1], [], []>} : vector<8x32xf32>, vector<32x32xf32>, vector<8x32xf32> -> vector<8x32xf32>
    %124 = arith.addf %122, %123 : vector<8x32xf32>
    %cst_71 = arith.constant 0.000000e+00 : f32
    %125 = vector.broadcast %cst_71 : f32 to vector<8x32xf32>
    %126 = arith.maximumf %124, %125 : vector<8x32xf32>
    %c40_72 = arith.constant 40 : index
    %c0_73 = arith.constant 0 : index
    %127 = vector.load %arg11[%c40_72, %c0_73] : memref<64x32xf32, #tpu.memory_space<vmem>>, vector<8x32xf32>
    tpu.vector_store %arg11[%c40_72, %c0_73], %126 {strides = array<i32>} : memref<64x32xf32, #tpu.memory_space<vmem>>, vector<8x32xf32>,
    %128 = vector.extract_strided_slice %89 {offsets = [48, 0], sizes = [8, 32], strides = [1, 1]} : vector<64x32xf32> to vector<8x32xf32>
    %cst_74 = arith.constant dense<0.000000e+00> : vector<8x32xf32>
    %129 = tpu.matmul %126, %90, %cst_74 {dimension_numbers = #tpu.dot_dimension_numbers<[1], [0], [0], [1], [0, 0, 1, 1], [], []>} : vector<8x32xf32>, vector<32x32xf32>, vector<8x32xf32> -> vector<8x32xf32>
    %130 = arith.addf %128, %129 : vector<8x32xf32>
    %cst_75 = arith.constant 0.000000e+00 : f32
    %131 = vector.broadcast %cst_75 : f32 to vector<8x32xf32>
    %132 = arith.maximumf %130, %131 : vector<8x32xf32>
    %c48_76 = arith.constant 48 : index
    %c0_77 = arith.constant 0 : index
    %133 = vector.load %arg11[%c48_76, %c0_77] : memref<64x32xf32, #tpu.memory_space<vmem>>, vector<8x32xf32>
    tpu.vector_store %arg11[%c48_76, %c0_77], %132 {strides = array<i32>} : memref<64x32xf32, #tpu.memory_space<vmem>>, vector<8x32xf32>,
    %134 = vector.extract_strided_slice %89 {offsets = [56, 0], sizes = [8, 32], strides = [1, 1]} : vector<64x32xf32> to vector<8x32xf32>
    %cst_78 = arith.constant dense<0.000000e+00> : vector<8x32xf32>
    %135 = tpu.matmul %132, %90, %cst_78 {dimension_numbers = #tpu.dot_dimension_numbers<[1], [0], [0], [1], [0, 0, 1, 1], [], []>} : vector<8x32xf32>, vector<32x32xf32>, vector<8x32xf32> -> vector<8x32xf32>
    %136 = arith.addf %134, %135 : vector<8x32xf32>
    %cst_79 = arith.constant 0.000000e+00 : f32
    %137 = vector.broadcast %cst_79 : f32 to vector<8x32xf32>
    %138 = arith.maximumf %136, %137 : vector<8x32xf32>
    %c56_80 = arith.constant 56 : index
    %c0_81 = arith.constant 0 : index
    %139 = vector.load %arg11[%c56_80, %c0_81] : memref<64x32xf32, #tpu.memory_space<vmem>>, vector<8x32xf32>
    tpu.vector_store %arg11[%c56_80, %c0_81], %138 {strides = array<i32>} : memref<64x32xf32, #tpu.memory_space<vmem>>, vector<8x32xf32>,
    %140 = vector.extract_strided_slice %138 {offsets = [0, 0], sizes = [2, 32], strides = [1, 1]} : vector<8x32xf32> to vector<2x32xf32>
    %c1_82 = arith.constant 1 : index
    %c0_83 = arith.constant 0 : index
    %c0_84 = arith.constant 0 : index
    %141 = vector.load %arg10[%c1_82, %c0_83, %c0_84] : memref<2x2x32xf32, #tpu.memory_space<vmem>>, vector<1x2x32xf32>
    %142 = vector.shape_cast %141 : vector<1x2x32xf32> to vector<2x32xf32>
    %143 = vector.shape_cast %140 : vector<2x32xf32> to vector<1x2x32xf32>
    tpu.vector_store %arg10[%c1_82, %c0_83, %c0_84], %143 {strides = array<i32>} : memref<2x2x32xf32, #tpu.memory_space<vmem>>, vector<1x2x32xf32>,
    %c0_85 = arith.constant 0 : index
    %c0_86 = arith.constant 0 : index
    %144 = vector.load %arg11[%c0_85, %c0_86] : memref<64x32xf32, #tpu.memory_space<vmem>>, vector<64x32xf32>
    %c0_87 = arith.constant 0 : index
    %c0_88 = arith.constant 0 : index
    %145 = vector.load %arg7[%c0_87, %c0_88] : memref<32x4xf32, #tpu.memory_space<vmem>>, vector<32x4xf32>
    %cst_89 = arith.constant dense<0.000000e+00> : vector<64x4xf32>
    %146 = tpu.matmul %144, %145, %cst_89 {dimension_numbers = #tpu.dot_dimension_numbers<[1], [0], [0], [1], [0, 0, 1, 1], [], []>} : vector<64x32xf32>, vector<32x4xf32>, vector<64x4xf32> -> vector<64x4xf32>
    %c0_90 = arith.constant 0 : index
    %c0_91 = arith.constant 0 : index
    %147 = vector.load %arg8[%c0_90, %c0_91] : memref<1x4xf32, #tpu.memory_space<vmem>>, vector<1x4xf32>
    %148 = vector.broadcast %147 : vector<1x4xf32> to vector<64x4xf32>
    %149 = arith.addf %146, %148 : vector<64x4xf32>
    %150 = vector.extract_strided_slice %149 {offsets = [0, 0], sizes = [1, 4], strides = [1, 1]} : vector<64x4xf32> to vector<1x4xf32>
    %151 = vector.extract_strided_slice %149 {offsets = [8, 0], sizes = [1, 4], strides = [1, 1]} : vector<64x4xf32> to vector<1x4xf32>
    %152 = vector.extract_strided_slice %149 {offsets = [16, 0], sizes = [1, 4], strides = [1, 1]} : vector<64x4xf32> to vector<1x4xf32>
    %153 = vector.extract_strided_slice %149 {offsets = [24, 0], sizes = [1, 4], strides = [1, 1]} : vector<64x4xf32> to vector<1x4xf32>
    %154 = vector.extract_strided_slice %149 {offsets = [32, 0], sizes = [1, 4], strides = [1, 1]} : vector<64x4xf32> to vector<1x4xf32>
    %155 = vector.extract_strided_slice %149 {offsets = [40, 0], sizes = [1, 4], strides = [1, 1]} : vector<64x4xf32> to vector<1x4xf32>
    %156 = vector.extract_strided_slice %149 {offsets = [48, 0], sizes = [1, 4], strides = [1, 1]} : vector<64x4xf32> to vector<1x4xf32>
    %157 = vector.extract_strided_slice %149 {offsets = [56, 0], sizes = [1, 4], strides = [1, 1]} : vector<64x4xf32> to vector<1x4xf32>
    %158 = tpu.concatenate %150, %151, %152, %153, %154, %155, %156, %157 in 0 : vector<1x4xf32>, vector<1x4xf32>, vector<1x4xf32>, vector<1x4xf32>, vector<1x4xf32>, vector<1x4xf32>, vector<1x4xf32>, vector<1x4xf32> -> vector<8x4xf32>
    %c0_92 = arith.constant 0 : index
    %c0_93 = arith.constant 0 : index
    %159 = vector.load %arg9[%c0_92, %c0_93] : memref<16x4xf32, #tpu.memory_space<vmem>>, vector<8x4xf32>
    tpu.vector_store %arg9[%c0_92, %c0_93], %158 {strides = array<i32>} : memref<16x4xf32, #tpu.memory_space<vmem>>, vector<8x4xf32>,
    %160 = vector.extract_strided_slice %149 {offsets = [1, 0], sizes = [1, 4], strides = [1, 1]} : vector<64x4xf32> to vector<1x4xf32>
    %161 = vector.extract_strided_slice %149 {offsets = [9, 0], sizes = [1, 4], strides = [1, 1]} : vector<64x4xf32> to vector<1x4xf32>
    %162 = vector.extract_strided_slice %149 {offsets = [17, 0], sizes = [1, 4], strides = [1, 1]} : vector<64x4xf32> to vector<1x4xf32>
    %163 = vector.extract_strided_slice %149 {offsets = [25, 0], sizes = [1, 4], strides = [1, 1]} : vector<64x4xf32> to vector<1x4xf32>
    %164 = vector.extract_strided_slice %149 {offsets = [33, 0], sizes = [1, 4], strides = [1, 1]} : vector<64x4xf32> to vector<1x4xf32>
    %165 = vector.extract_strided_slice %149 {offsets = [41, 0], sizes = [1, 4], strides = [1, 1]} : vector<64x4xf32> to vector<1x4xf32>
    %166 = vector.extract_strided_slice %149 {offsets = [49, 0], sizes = [1, 4], strides = [1, 1]} : vector<64x4xf32> to vector<1x4xf32>
    %167 = vector.extract_strided_slice %149 {offsets = [57, 0], sizes = [1, 4], strides = [1, 1]} : vector<64x4xf32> to vector<1x4xf32>
    %168 = tpu.concatenate %160, %161, %162, %163, %164, %165, %166, %167 in 0 : vector<1x4xf32>, vector<1x4xf32>, vector<1x4xf32>, vector<1x4xf32>, vector<1x4xf32>, vector<1x4xf32>, vector<1x4xf32>, vector<1x4xf32> -> vector<8x4xf32>
    %c8_94 = arith.constant 8 : index
    %c0_95 = arith.constant 0 : index
    %169 = vector.load %arg9[%c8_94, %c0_95] : memref<16x4xf32, #tpu.memory_space<vmem>>, vector<8x4xf32>
    tpu.vector_store %arg9[%c8_94, %c0_95], %168 {strides = array<i32>} : memref<16x4xf32, #tpu.memory_space<vmem>>, vector<8x4xf32>,
    return
  }
}

</mosaic_0001>

<llo_original>
// kernel: forward.1
$region0: #{forward.1}
  #allocation0 [shape = 'u32[]', space=smem, size = 0x4, offset = 0x4, fixed_abs, tag = 'smem constant byte address 0x4 - core index']
  #allocation1 [shape = 'u32[144,128]{1,0:T(1,128)}', space=vmem, size = 0x12000, scoped, tag = 'internal scratch']
  #allocation2 [shape = 'f32[64,32]{1,0:T(8,128)}', space=vmem, size = 0x8000, scoped, tag = 'scratch operand']
  %s0 = inlined_call_operand.vmem [shape: f32[2,8,16], index: 0, kind: input, shape index: {}]
  %s1 = inlined_call_operand.hbm [shape: f32[16,32], index: 1, kind: input, shape index: {}]
  %s2 = inlined_call_operand.vmem [shape: f32[32,32], index: 2, kind: input, shape index: {}]
  %s3 = inlined_call_operand.hbm [shape: f32[1,32], index: 3, kind: input, shape index: {}]
  %s4 = inlined_call_operand.hbm [shape: f32[32,32], index: 4, kind: input, shape index: {}]
  %s5 = inlined_call_operand.hbm [shape: f32[32,32], index: 5, kind: input, shape index: {}]
  %s6 = inlined_call_operand.hbm [shape: f32[1,32], index: 6, kind: input, shape index: {}]
  %s7 = inlined_call_operand.vmem [shape: f32[32,4], index: 7, kind: input, shape index: {}]
  %s8 = inlined_call_operand.hbm [shape: f32[1,4], index: 8, kind: input, shape index: {}]
  %s9 = inlined_call_operand.vmem [shape: f32[16,4], index: 9, kind: output, shape index: {0}]
  %s10 = inlined_call_operand.hbm [shape: f32[2,2,32], index: 10, kind: output, shape index: {1}]
  %11 = xla_tuple %s9, %s10
  %s12 = sld [smem:[#allocation0]]
  $region78: #{forward.1} parent=0
    _
  %s14 = ssub.s32 1, %s12
  %s15 = scalar_select 0, %s14, %s12
  $region1: #{forward.1} parent=0
    #allocation3 [shape = 'u8[8192]{0}', space=vmem, size = 0x2000, scoped, tag = 'input window, operand 1, single buffered']
    #allocation4 [shape = 's32[1]{0}', space=sflag, size = 0x4, scoped, tag = 'scoped memory for forward.1']
    #allocation5 [shape = 's32[1]{0}', space=sflag, size = 0x4, scoped, tag = 'scoped memory for forward.1']
    #allocation6 [shape = 'u8[512]{0}', space=vmem, size = 0x400, scoped, tag = 'input window, operand 3, single buffered']
    #allocation7 [shape = 's32[1]{0}', space=sflag, size = 0x4, scoped, tag = 'scoped memory for forward.1']
    #allocation8 [shape = 'u8[16384]{0}', space=vmem, size = 0x4000, scoped, tag = 'input window, operand 4, single buffered']
    #allocation9 [shape = 'u8[16384]{0}', space=vmem, size = 0x4000, scoped, tag = 'input window, operand 5, single buffered']
    #allocation10 [shape = 's32[1]{0}', space=sflag, size = 0x4, scoped, tag = 'scoped memory for forward.1']
    #allocation11 [shape = 'u8[512]{0}', space=vmem, size = 0x400, scoped, tag = 'input window, operand 6, single buffered']
    #allocation12 [shape = 'u8[512]{0}', space=vmem, size = 0x400, scoped, tag = 'input window, operand 8, single buffered']
    #allocation13 [shape = 's32[1]{0}', space=sflag, size = 0x4, scoped, tag = 'scoped memory for forward.1']
    #allocation14 [shape = 'u8[2048]{0}', space=vmem, size = 0x800, scoped, tag = 'output window, operand 1, single buffered']
    %16 = vsyncpa [#allocation4], 0
    %17 = vsyncpa [#allocation7], 0
    %18 = vsyncpa [#allocation10], 0
    %19 = vsyncpa [#allocation13], 0
    %20 = vsyncpa [#allocation5], 0
    // Predicated region
    $region2: #{forward.1} parent=1 // pred_check
      _
    $region3: #{forward.1} parent=1 // pred_check_branch
      %22 = sbr.rel (0) target = $region5
    $region4: #{forward.1} parent=1 // pred_region
      _
    $region5: #{forward.1} parent=1 // pred_fallthru
      _
    // Predicated region
    $region6: #{forward.1} parent=1 // pred_check
      _
    $region7: #{forward.1} parent=1 // pred_check_branch
      %24 = sbr.rel (0) target = $region9
    $region8: #{forward.1} parent=1 // pred_region
      %s26 = ssub.s32 256, 256
      %27 = vsyncadd [#allocation4], %s26
      %s28 = sshll.u32 [#allocation3], 4
      %s29 = int_to_ptr.vmem [resolvable:$true] %s28
      %34 = dma.hbm_to_vmem [thread:$0]  %s1, 256, %s29, [#allocation4], 128, 128, 8
    $region9: #{forward.1} parent=1 // pred_fallthru
      _
    // Predicated region
    $region10: #{forward.1} parent=1 // pred_check
      _
    $region11: #{forward.1} parent=1 // pred_check_branch
      %36 = sbr.rel (0) target = $region13
    $region12: #{forward.1} parent=1 // pred_region
      _
    $region13: #{forward.1} parent=1 // pred_fallthru
      _
    // Predicated region
    $region14: #{forward.1} parent=1 // pred_check
      _
    $region15: #{forward.1} parent=1 // pred_check_branch
      %38 = sbr.rel (0) target = $region17
    $region16: #{forward.1} parent=1 // pred_region
      %s40 = ssub.s32 16, 16
      %41 = vsyncadd [#allocation7], %s40
      %s43 = sshll.u32 [#allocation6], 4
      %s44 = int_to_ptr.vmem [resolvable:$true] %s43
      %46 = dma.hbm_to_vmem [thread:$0]  %s3, 16, %s44, [#allocation7]
    $region17: #{forward.1} parent=1 // pred_fallthru
      _
    // Predicated region
    $region18: #{forward.1} parent=1 // pred_check
      _
    $region19: #{forward.1} parent=1 // pred_check_branch
      %48 = sbr.rel (0) target = $region21
    $region20: #{forward.1} parent=1 // pred_region
      %s50 = ssub.s32 512, 512
      %51 = vsyncadd [#allocation7], %s50
      %s52 = sshll.u32 [#allocation8], 4
      %s53 = int_to_ptr.vmem [resolvable:$true] %s52
      %58 = dma.hbm_to_vmem [thread:$0]  %s4, 512, %s53, [#allocation7], 128, 128, 8
    $region21: #{forward.1} parent=1 // pred_fallthru
      _
    // Predicated region
    $region22: #{forward.1} parent=1 // pred_check
      _
    $region23: #{forward.1} parent=1 // pred_check_branch
      %60 = sbr.rel (0) target = $region25
    $region24: #{forward.1} parent=1 // pred_region
      %s62 = ssub.s32 512, 512
      %63 = vsyncadd [#allocation10], %s62
      %s64 = sshll.u32 [#allocation9], 4
      %s65 = int_to_ptr.vmem [resolvable:$true] %s64
      %70 = dma.hbm_to_vmem [thread:$0]  %s5, 512, %s65, [#allocation10], 128, 128, 8
    $region25: #{forward.1} parent=1 // pred_fallthru
      _
    // Predicated region
    $region26: #{forward.1} parent=1 // pred_check
      _
    $region27: #{forward.1} parent=1 // pred_check_branch
      %72 = sbr.rel (0) target = $region29
    $region28: #{forward.1} parent=1 // pred_region
      %s74 = ssub.s32 16, 16
      %75 = vsyncadd [#allocation10], %s74
      %s77 = sshll.u32 [#allocation11], 4
      %s78 = int_to_ptr.vmem [resolvable:$true] %s77
      %80 = dma.hbm_to_vmem [thread:$0]  %s6, 16, %s78, [#allocation10]
    $region29: #{forward.1} parent=1 // pred_fallthru
      _
    // Predicated region
    $region30: #{forward.1} parent=1 // pred_check
      _
    $region31: #{forward.1} parent=1 // pred_check_branch
      %82 = sbr.rel (0) target = $region33
    $region32: #{forward.1} parent=1 // pred_region
      _
    $region33: #{forward.1} parent=1 // pred_fallthru
      _
    // Predicated region
    $region34: #{forward.1} parent=1 // pred_check
      _
    $region35: #{forward.1} parent=1 // pred_check_branch
      %84 = sbr.rel (0) target = $region37
    $region36: #{forward.1} parent=1 // pred_region
      %s86 = ssub.s32 16, 16
      %87 = vsyncadd [#allocation13], %s86
      %s89 = sshll.u32 [#allocation12], 4
      %s90 = int_to_ptr.vmem [resolvable:$true] %s89
      %92 = dma.hbm_to_vmem [thread:$0]  %s8, 16, %s90, [#allocation13]
    $region37: #{forward.1} parent=1 // pred_fallthru
      _
    // Predicated region
    $region38: #{forward.1} parent=1 // pred_check
      _
    $region39: #{forward.1} parent=1 // pred_check_branch
      %94 = sbr.rel (0) target = $region41
    $region40: #{forward.1} parent=1 // pred_region
      %95 = dma.done [#allocation4], 256
    $region41: #{forward.1} parent=1 // pred_fallthru
      _
    // Predicated region
    $region42: #{forward.1} parent=1 // pred_check
      _
    $region43: #{forward.1} parent=1 // pred_check_branch
      %97 = sbr.rel (0) target = $region45
    $region44: #{forward.1} parent=1 // pred_region
      %98 = dma.done [#allocation7], 16
    $region45: #{forward.1} parent=1 // pred_fallthru
      _
    // Predicated region
    $region46: #{forward.1} parent=1 // pred_check
      _
    $region47: #{forward.1} parent=1 // pred_check_branch
      %100 = sbr.rel (0) target = $region49
    $region48: #{forward.1} parent=1 // pred_region
      %101 = dma.done [#allocation7], 512
    $region49: #{forward.1} parent=1 // pred_fallthru
      _
    // Predicated region
    $region50: #{forward.1} parent=1 // pred_check
      _
    $region51: #{forward.1} parent=1 // pred_check_branch
      %103 = sbr.rel (0) target = $region53
    $region52: #{forward.1} parent=1 // pred_region
      %104 = dma.done [#allocation10], 512
    $region53: #{forward.1} parent=1 // pred_fallthru
      _
    // Predicated region
    $region54: #{forward.1} parent=1 // pred_check
      _
    $region55: #{forward.1} parent=1 // pred_check_branch
      %106 = sbr.rel (0) target = $region57
    $region56: #{forward.1} parent=1 // pred_region
      %107 = dma.done [#allocation10], 16
    $region57: #{forward.1} parent=1 // pred_fallthru
      _
    // Predicated region
    $region58: #{forward.1} parent=1 // pred_check
      _
    $region59: #{forward.1} parent=1 // pred_check_branch
      %109 = sbr.rel (0) target = $region61
    $region60: #{forward.1} parent=1 // pred_region
      %110 = dma.done [#allocation13], 16
    $region61: #{forward.1} parent=1 // pred_fallthru
      _
    %v111 = vld [vmem:[%s0] sm:$0xff]
    %s112 = scalar_lea.vmem %s0, 8
    %v113 = vld [vmem:[%s112] sm:$0xff]
    %v114 = vld [vmem:[#allocation3] sm:$0xff]
    %v115 = vld [vmem:[#allocation3 + $0x8] sm:$0xff]
    %v116 = vld [vmem:[#allocation6] sm:$0x1]
    %v118 = vlaneseq
    %v119 = vshrl.u32 %v118, 7
    %v120 = vsub.s32 0, %v119
    %v121 = vrot.slane %v116, %v120
    %vm123 = vcmask 130048
    %v125 = vsel %vm123, %v111, 0
    %v128 = vsel %vm123, %v113, 0
    %130 = vmatprep.subr.mxu0 0.0
    %131 = vmatpush1.msra.mxu0 0.0
    %132 = vmatprep.subr.mxu0 0.0
    %133 = vmatpush1.msra.mxu0 0.0
    %134 = vmatprep.subr.mxu0 0.0
    %135 = vmatpush1.msra.mxu0 0.0
    %136 = vmatprep.subr.mxu0 0.0
    %137 = vmatpush1.msra.mxu0 0.0
    %138 = vmatprep.subr.mxu0 0.0
    %139 = vmatpush1.msra.mxu0 0.0
    %140 = vmatprep.subr.mxu0 0.0
    %141 = vmatpush1.msra.mxu0 0.0
    %142 = vmatprep.subr.mxu0 0.0
    %143 = vmatpush1.msra.mxu0 0.0
    %144 = vmatprep.subr.mxu0 0.0
    %145 = vmatpush1.msra.mxu0 0.0
    %146 = vmatprep.subr.mxu0 0.0
    %147 = vmatpush1.msra.mxu0 0.0
    %148 = vmatprep.subr.mxu0 0.0
    %149 = vmatpush1.msra.mxu0 0.0
    %150 = vmatprep.subr.mxu0 0.0
    %151 = vmatpush1.msra.mxu0 0.0
    %152 = vmatprep.subr.mxu0 0.0
    %153 = vmatpush1.msra.mxu0 0.0
    %154 = vmatprep.subr.mxu0 0.0
    %155 = vmatpush1.msra.mxu0 0.0
    %156 = vmatprep.subr.mxu0 0.0
    %157 = vmatpush1.msra.mxu0 0.0
    %158 = vmatprep.subr.mxu0 0.0
    %159 = vmatpush1.msra.mxu0 %v115
    %160 = vmatprep.subr.mxu0 0.0
    %161 = vmatpush1.msra.mxu0 %v114
    %162 = vmatprep.subr.mxu0 0.0
    %163 = vmatpush2.msra.mxu0 0.0
    %164 = vmatprep.subr.mxu0 0.0
    %165 = vmatpush2.msra.mxu0 0.0
    %166 = vmatprep.subr.mxu0 0.0
    %167 = vmatpush2.msra.mxu0 0.0
    %168 = vmatprep.subr.mxu0 0.0
    %169 = vmatpush2.msra.mxu0 0.0
    %170 = vmatprep.subr.mxu0 0.0
    %171 = vmatpush2.msra.mxu0 0.0
    %172 = vmatprep.subr.mxu0 0.0
    %173 = vmatpush2.msra.mxu0 0.0
    %174 = vmatprep.subr.mxu0 0.0
    %175 = vmatpush2.msra.mxu0 0.0
    %176 = vmatprep.subr.mxu0 0.0
    %177 = vmatpush2.msra.mxu0 0.0
    %178 = vmatprep.subr.mxu0 0.0
    %179 = vmatpush2.msra.mxu0 0.0
    %180 = vmatprep.subr.mxu0 0.0
    %181 = vmatpush2.msra.mxu0 0.0
    %182 = vmatprep.subr.mxu0 0.0
    %183 = vmatpush2.msra.mxu0 0.0
    %184 = vmatprep.subr.mxu0 0.0
    %185 = vmatpush2.msra.mxu0 0.0
    %186 = vmatprep.subr.mxu0 0.0
    %187 = vmatpush2.msra.mxu0 0.0
    %188 = vmatprep.subr.mxu0 0.0
    %189 = vmatpush2.msra.mxu0 0.0
    %190 = vmatprep.subr.mxu0 0.0
    %191 = vmatpush2.msra.mxu0 0.0
    %192 = vmatprep.subr.mxu0 0.0
    %193 = vmatpush2.msra.mxu0 0.0
    %194 = vmatprep.mubr.f32.mxu0 0.0
    %195 = vmatmul.mubr.f32.gmra.mxu0 %v125
    %v196 = vpop.f32.mrf.mxu0
    %v197 = vadd.f32 %v121, %v196
    %v198 = vpop.f32.mrf.mxu0
    %199 = vmatprep.mubr.f32.mxu0 0.0
    %200 = vmatmul.mubr.f32.gmra.mxu0 %v128
    %v201 = vpop.f32.mrf.mxu0
    %v202 = vadd.f32 %v121, %v201
    %v203 = vpop.f32.mrf.mxu0
    %204 = vdwg.mxu0
    %v206 = vrot.slane %v202, 7
    %v209 = vrot.slane %v197, 1
    %v211 = vrot.slane %v197, 2
    %v213 = vrot.slane %v202, 1
    %v215 = vrot.slane %v197, 3
    %v217 = vrot.slane %v202, 2
    %v219 = vrot.slane %v197, 4
    %v221 = vrot.slane %v202, 3
    %v223 = vrot.slane %v197, 5
    %vm225 = vcmask 1040384
    %v226 = vsel %vm225, %v197, %v206
    %vm227 = vcmask 1041408
    %v228 = vsel %vm227, %v226, 0.0
    %v229 = vsel %vm225, %v209, %v202
    %v230 = vsel %vm227, %v229, 0.0
    %v231 = vsel %vm225, %v211, %v213
    %v232 = vsel %vm227, %v231, 0.0
    %v233 = vsel %vm225, %v215, %v217
    %v234 = vsel %vm227, %v233, 0.0
    %v235 = vsel %vm225, %v219, %v221
    %v236 = vsel %vm227, %v235, 0.0
    %v237 = vrot.slane %v202, 5
    %v239 = vrot.slane %v197, 7
    %v241 = vrot.slane %v202, 6
    %v243 = vsel %vm225, %v237, 0.0
    %vm244 = vcmask 1046528
    %v245 = vsel %vm244, %v243, %v239
    %v246 = vsel %vm225, %v241, 0.0
    %v247 = vsel %vm244, %v246, %v197
    %v248 = vsel %vm225, %v206, 0.0
    %v252 = vrot.slane %v245, 7
    %v253 = vrot.slane %v247, 7
    %v254 = vsel %vm225, %v252, %v253
    %v255 = vrot.slane %v248, 7
    %v256 = vsel %vm225, %v253, %v255
    %v260 = vsel %vm225, %v223, %v252
    %v261 = vld [vmem:[%s2] sm:$0xff]
    %v262 = vld [vmem:[%s2 + $0x8] sm:$0xff]
    %v263 = vld [vmem:[%s2 + $0x10] sm:$0xff]
    %v264 = vld [vmem:[%s2 + $0x18] sm:$0xff]
    %vm265 = vcmask 261120
    %v267 = vsel %vm265, 0.0, 0
    %269 = vmatprep.subr.mxu0 0.0
    %270 = vmatpush1.msra.mxu0 0.0
    %271 = vmatprep.subr.mxu0 0.0
    %272 = vmatpush1.msra.mxu0 0.0
    %273 = vmatprep.subr.mxu0 0.0
    %274 = vmatpush1.msra.mxu0 0.0
    %275 = vmatprep.subr.mxu0 0.0
    %276 = vmatpush1.msra.mxu0 0.0
    %277 = vmatprep.subr.mxu0 0.0
    %278 = vmatpush1.msra.mxu0 0.0
    %279 = vmatprep.subr.mxu0 0.0
    %280 = vmatpush1.msra.mxu0 0.0
    %281 = vmatprep.subr.mxu0 0.0
    %282 = vmatpush1.msra.mxu0 0.0
    %283 = vmatprep.subr.mxu0 0.0
    %284 = vmatpush1.msra.mxu0 0.0
    %285 = vmatprep.subr.mxu0 0.0
    %286 = vmatpush1.msra.mxu0 0.0
    %287 = vmatprep.subr.mxu0 0.0
    %288 = vmatpush1.msra.mxu0 0.0
    %289 = vmatprep.subr.mxu0 0.0
    %290 = vmatpush1.msra.mxu0 0.0
    %291 = vmatprep.subr.mxu0 0.0
    %292 = vmatpush1.msra.mxu0 0.0
    %293 = vmatprep.subr.mxu0 0.0
    %294 = vmatpush1.msra.mxu0 %v264
    %295 = vmatprep.subr.mxu0 0.0
    %296 = vmatpush1.msra.mxu0 %v263
    %297 = vmatprep.subr.mxu0 0.0
    %298 = vmatpush1.msra.mxu0 %v262
    %299 = vmatprep.subr.mxu0 0.0
    %300 = vmatpush1.msra.mxu0 %v261
    %301 = vmatprep.subr.mxu0 0.0
    %302 = vmatpush2.msra.mxu0 0.0
    %303 = vmatprep.subr.mxu0 0.0
    %304 = vmatpush2.msra.mxu0 0.0
    %305 = vmatprep.subr.mxu0 0.0
    %306 = vmatpush2.msra.mxu0 0.0
    %307 = vmatprep.subr.mxu0 0.0
    %308 = vmatpush2.msra.mxu0 0.0
    %309 = vmatprep.subr.mxu0 0.0
    %310 = vmatpush2.msra.mxu0 0.0
    %311 = vmatprep.subr.mxu0 0.0
    %312 = vmatpush2.msra.mxu0 0.0
    %313 = vmatprep.subr.mxu0 0.0
    %314 = vmatpush2.msra.mxu0 0.0
    %315 = vmatprep.subr.mxu0 0.0
    %316 = vmatpush2.msra.mxu0 0.0
    %317 = vmatprep.subr.mxu0 0.0
    %318 = vmatpush2.msra.mxu0 0.0
    %319 = vmatprep.subr.mxu0 0.0
    %320 = vmatpush2.msra.mxu0 0.0
    %321 = vmatprep.subr.mxu0 0.0
    %322 = vmatpush2.msra.mxu0 0.0
    %323 = vmatprep.subr.mxu0 0.0
    %324 = vmatpush2.msra.mxu0 0.0
    %325 = vmatprep.subr.mxu0 0.0
    %326 = vmatpush2.msra.mxu0 0.0
    %327 = vmatprep.subr.mxu0 0.0
    %328 = vmatpush2.msra.mxu0 0.0
    %329 = vmatprep.subr.mxu0 0.0
    %330 = vmatpush2.msra.mxu0 0.0
    %331 = vmatprep.subr.mxu0 0.0
    %332 = vmatpush2.msra.mxu0 0.0
    %333 = vmatprep.mubr.f32.mxu0 0.0
    %334 = vmatmul.mubr.f32.gmra.mxu0 %v267
    %v335 = vpop.f32.mrf.mxu0
    %v336 = vadd.f32 0.0, %v335
    %v337 = vpop.f32.mrf.mxu0
    %338 = vdwg.mxu0
    %v339 = vadd.f32 %v228, %v336
    %v340 = vmax.f32 %v339, 0.0
    %341 = vst.msk [vmem:[#allocation2] sm:$0xff] %vm265, %v340
    %v343 = vsel %vm265, %v340, 0
    %345 = vmatprep.subr.mxu0 0.0
    %346 = vmatpush1.msra.mxu0 0.0
    %347 = vmatprep.subr.mxu0 0.0
    %348 = vmatpush1.msra.mxu0 0.0
    %349 = vmatprep.subr.mxu0 0.0
    %350 = vmatpush1.msra.mxu0 0.0
    %351 = vmatprep.subr.mxu0 0.0
    %352 = vmatpush1.msra.mxu0 0.0
    %353 = vmatprep.subr.mxu0 0.0
    %354 = vmatpush1.msra.mxu0 0.0
    %355 = vmatprep.subr.mxu0 0.0
    %356 = vmatpush1.msra.mxu0 0.0
    %357 = vmatprep.subr.mxu0 0.0
    %358 = vmatpush1.msra.mxu0 0.0
    %359 = vmatprep.subr.mxu0 0.0
    %360 = vmatpush1.msra.mxu0 0.0
    %361 = vmatprep.subr.mxu0 0.0
    %362 = vmatpush1.msra.mxu0 0.0
    %363 = vmatprep.subr.mxu0 0.0
    %364 = vmatpush1.msra.mxu0 0.0
    %365 = vmatprep.subr.mxu0 0.0
    %366 = vmatpush1.msra.mxu0 0.0
    %367 = vmatprep.subr.mxu0 0.0
    %368 = vmatpush1.msra.mxu0 0.0
    %369 = vmatprep.subr.mxu0 0.0
    %370 = vmatpush1.msra.mxu0 %v264
    %371 = vmatprep.subr.mxu0 0.0
    %372 = vmatpush1.msra.mxu0 %v263
    %373 = vmatprep.subr.mxu0 0.0
    %374 = vmatpush1.msra.mxu0 %v262
    %375 = vmatprep.subr.mxu0 0.0
    %376 = vmatpush1.msra.mxu0 %v261
    %377 = vmatprep.subr.mxu0 0.0
    %378 = vmatpush2.msra.mxu0 0.0
    %379 = vmatprep.subr.mxu0 0.0
    %380 = vmatpush2.msra.mxu0 0.0
    %381 = vmatprep.subr.mxu0 0.0
    %382 = vmatpush2.msra.mxu0 0.0
    %383 = vmatprep.subr.mxu0 0.0
    %384 = vmatpush2.msra.mxu0 0.0
    %385 = vmatprep.subr.mxu0 0.0
    %386 = vmatpush2.msra.mxu0 0.0
    %387 = vmatprep.subr.mxu0 0.0
    %388 = vmatpush2.msra.mxu0 0.0
    %389 = vmatprep.subr.mxu0 0.0
    %390 = vmatpush2.msra.mxu0 0.0
    %391 = vmatprep.subr.mxu0 0.0
    %392 = vmatpush2.msra.mxu0 0.0
    %393 = vmatprep.subr.mxu0 0.0
    %394 = vmatpush2.msra.mxu0 0.0
    %395 = vmatprep.subr.mxu0 0.0
    %396 = vmatpush2.msra.mxu0 0.0
    %397 = vmatprep.subr.mxu0 0.0
    %398 = vmatpush2.msra.mxu0 0.0
    %399 = vmatprep.subr.mxu0 0.0
    %400 = vmatpush2.msra.mxu0 0.0
    %401 = vmatprep.subr.mxu0 0.0
    %402 = vmatpush2.msra.mxu0 0.0
    %403 = vmatprep.subr.mxu0 0.0
    %404 = vmatpush2.msra.mxu0 0.0
    %405 = vmatprep.subr.mxu0 0.0
    %406 = vmatpush2.msra.mxu0 0.0
    %407 = vmatprep.subr.mxu0 0.0
    %408 = vmatpush2.msra.mxu0 0.0
    %409 = vmatprep.mubr.f32.mxu0 0.0
    %410 = vmatmul.mubr.f32.gmra.mxu0 %v343
    %v411 = vpop.f32.mrf.mxu0
    %v412 = vadd.f32 0.0, %v411
    %v413 = vpop.f32.mrf.mxu0
    %414 = vdwg.mxu0
    %v415 = vadd.f32 %v230, %v412
    %v416 = vmax.f32 %v415, 0.0
    %417 = vst.msk [vmem:[#allocation2 + $0x8] sm:$0xff] %vm265, %v416
    %v419 = vsel %vm265, %v416, 0
    %421 = vmatprep.subr.mxu0 0.0
    %422 = vmatpush1.msra.mxu0 0.0
    %423 = vmatprep.subr.mxu0 0.0
    %424 = vmatpush1.msra.mxu0 0.0
    %425 = vmatprep.subr.mxu0 0.0
    %426 = vmatpush1.msra.mxu0 0.0
    %427 = vmatprep.subr.mxu0 0.0
    %428 = vmatpush1.msra.mxu0 0.0
    %429 = vmatprep.subr.mxu0 0.0
    %430 = vmatpush1.msra.mxu0 0.0
    %431 = vmatprep.subr.mxu0 0.0
    %432 = vmatpush1.msra.mxu0 0.0
    %433 = vmatprep.subr.mxu0 0.0
    %434 = vmatpush1.msra.mxu0 0.0
    %435 = vmatprep.subr.mxu0 0.0
    %436 = vmatpush1.msra.mxu0 0.0
    %437 = vmatprep.subr.mxu0 0.0
    %438 = vmatpush1.msra.mxu0 0.0
    %439 = vmatprep.subr.mxu0 0.0
    %440 = vmatpush1.msra.mxu0 0.0
    %441 = vmatprep.subr.mxu0 0.0
    %442 = vmatpush1.msra.mxu0 0.0
    %443 = vmatprep.subr.mxu0 0.0
    %444 = vmatpush1.msra.mxu0 0.0
    %445 = vmatprep.subr.mxu0 0.0
    %446 = vmatpush1.msra.mxu0 %v264
    %447 = vmatprep.subr.mxu0 0.0
    %448 = vmatpush1.msra.mxu0 %v263
    %449 = vmatprep.subr.mxu0 0.0
    %450 = vmatpush1.msra.mxu0 %v262
    %451 = vmatprep.subr.mxu0 0.0
    %452 = vmatpush1.msra.mxu0 %v261
    %453 = vmatprep.subr.mxu0 0.0
    %454 = vmatpush2.msra.mxu0 0.0
    %455 = vmatprep.subr.mxu0 0.0
    %456 = vmatpush2.msra.mxu0 0.0
    %457 = vmatprep.subr.mxu0 0.0
    %458 = vmatpush2.msra.mxu0 0.0
    %459 = vmatprep.subr.mxu0 0.0
    %460 = vmatpush2.msra.mxu0 0.0
    %461 = vmatprep.subr.mxu0 0.0
    %462 = vmatpush2.msra.mxu0 0.0
    %463 = vmatprep.subr.mxu0 0.0
    %464 = vmatpush2.msra.mxu0 0.0
    %465 = vmatprep.subr.mxu0 0.0
    %466 = vmatpush2.msra.mxu0 0.0
    %467 = vmatprep.subr.mxu0 0.0
    %468 = vmatpush2.msra.mxu0 0.0
    %469 = vmatprep.subr.mxu0 0.0
    %470 = vmatpush2.msra.mxu0 0.0
    %471 = vmatprep.subr.mxu0 0.0
    %472 = vmatpush2.msra.mxu0 0.0
    %473 = vmatprep.subr.mxu0 0.0
    %474 = vmatpush2.msra.mxu0 0.0
    %475 = vmatprep.subr.mxu0 0.0
    %476 = vmatpush2.msra.mxu0 0.0
    %477 = vmatprep.subr.mxu0 0.0
    %478 = vmatpush2.msra.mxu0 0.0
    %479 = vmatprep.subr.mxu0 0.0
    %480 = vmatpush2.msra.mxu0 0.0
    %481 = vmatprep.subr.mxu0 0.0
    %482 = vmatpush2.msra.mxu0 0.0
    %483 = vmatprep.subr.mxu0 0.0
    %484 = vmatpush2.msra.mxu0 0.0
    %485 = vmatprep.mubr.f32.mxu0 0.0
    %486 = vmatmul.mubr.f32.gmra.mxu0 %v419
    %v487 = vpop.f32.mrf.mxu0
    %v488 = vadd.f32 0.0, %v487
    %v489 = vpop.f32.mrf.mxu0
    %490 = vdwg.mxu0
    %v491 = vadd.f32 %v232, %v488
    %v492 = vmax.f32 %v491, 0.0
    %493 = vst.msk [vmem:[#allocation2 + $0x10] sm:$0xff] %vm265, %v492
    %v495 = vsel %vm265, %v492, 0
    %497 = vmatprep.subr.mxu0 0.0
    %498 = vmatpush1.msra.mxu0 0.0
    %499 = vmatprep.subr.mxu0 0.0
    %500 = vmatpush1.msra.mxu0 0.0
    %501 = vmatprep.subr.mxu0 0.0
    %502 = vmatpush1.msra.mxu0 0.0
    %503 = vmatprep.subr.mxu0 0.0
    %504 = vmatpush1.msra.mxu0 0.0
    %505 = vmatprep.subr.mxu0 0.0
    %506 = vmatpush1.msra.mxu0 0.0
    %507 = vmatprep.subr.mxu0 0.0
    %508 = vmatpush1.msra.mxu0 0.0
    %509 = vmatprep.subr.mxu0 0.0
    %510 = vmatpush1.msra.mxu0 0.0
    %511 = vmatprep.subr.mxu0 0.0
    %512 = vmatpush1.msra.mxu0 0.0
    %513 = vmatprep.subr.mxu0 0.0
    %514 = vmatpush1.msra.mxu0 0.0
    %515 = vmatprep.subr.mxu0 0.0
    %516 = vmatpush1.msra.mxu0 0.0
    %517 = vmatprep.subr.mxu0 0.0
    %518 = vmatpush1.msra.mxu0 0.0
    %519 = vmatprep.subr.mxu0 0.0
    %520 = vmatpush1.msra.mxu0 0.0
    %521 = vmatprep.subr.mxu0 0.0
    %522 = vmatpush1.msra.mxu0 %v264
    %523 = vmatprep.subr.mxu0 0.0
    %524 = vmatpush1.msra.mxu0 %v263
    %525 = vmatprep.subr.mxu0 0.0
    %526 = vmatpush1.msra.mxu0 %v262
    %527 = vmatprep.subr.mxu0 0.0
    %528 = vmatpush1.msra.mxu0 %v261
    %529 = vmatprep.subr.mxu0 0.0
    %530 = vmatpush2.msra.mxu0 0.0
    %531 = vmatprep.subr.mxu0 0.0
    %532 = vmatpush2.msra.mxu0 0.0
    %533 = vmatprep.subr.mxu0 0.0
    %534 = vmatpush2.msra.mxu0 0.0
    %535 = vmatprep.subr.mxu0 0.0
    %536 = vmatpush2.msra.mxu0 0.0
    %537 = vmatprep.subr.mxu0 0.0
    %538 = vmatpush2.msra.mxu0 0.0
    %539 = vmatprep.subr.mxu0 0.0
    %540 = vmatpush2.msra.mxu0 0.0
    %541 = vmatprep.subr.mxu0 0.0
    %542 = vmatpush2.msra.mxu0 0.0
    %543 = vmatprep.subr.mxu0 0.0
    %544 = vmatpush2.msra.mxu0 0.0
    %545 = vmatprep.subr.mxu0 0.0
    %546 = vmatpush2.msra.mxu0 0.0
    %547 = vmatprep.subr.mxu0 0.0
    %548 = vmatpush2.msra.mxu0 0.0
    %549 = vmatprep.subr.mxu0 0.0
    %550 = vmatpush2.msra.mxu0 0.0
    %551 = vmatprep.subr.mxu0 0.0
    %552 = vmatpush2.msra.mxu0 0.0
    %553 = vmatprep.subr.mxu0 0.0
    %554 = vmatpush2.msra.mxu0 0.0
    %555 = vmatprep.subr.mxu0 0.0
    %556 = vmatpush2.msra.mxu0 0.0
    %557 = vmatprep.subr.mxu0 0.0
    %558 = vmatpush2.msra.mxu0 0.0
    %559 = vmatprep.subr.mxu0 0.0
    %560 = vmatpush2.msra.mxu0 0.0
    %561 = vmatprep.mubr.f32.mxu0 0.0
    %562 = vmatmul.mubr.f32.gmra.mxu0 %v495
    %v563 = vpop.f32.mrf.mxu0
    %v564 = vadd.f32 0.0, %v563
    %v565 = vpop.f32.mrf.mxu0
    %566 = vdwg.mxu0
    %v567 = vadd.f32 %v234, %v564
    %v568 = vmax.f32 %v567, 0.0
    %569 = vst.msk [vmem:[#allocation2 + $0x18] sm:$0xff] %vm265, %v568
    %v571 = vsel %vm265, %v568, 0
    %573 = vmatprep.subr.mxu0 0.0
    %574 = vmatpush1.msra.mxu0 0.0
    %575 = vmatprep.subr.mxu0 0.0
    %576 = vmatpush1.msra.mxu0 0.0
    %577 = vmatprep.subr.mxu0 0.0
    %578 = vmatpush1.msra.mxu0 0.0
    %579 = vmatprep.subr.mxu0 0.0
    %580 = vmatpush1.msra.mxu0 0.0
    %581 = vmatprep.subr.mxu0 0.0
    %582 = vmatpush1.msra.mxu0 0.0
    %583 = vmatprep.subr.mxu0 0.0
    %584 = vmatpush1.msra.mxu0 0.0
    %585 = vmatprep.subr.mxu0 0.0
    %586 = vmatpush1.msra.mxu0 0.0
    %587 = vmatprep.subr.mxu0 0.0
    %588 = vmatpush1.msra.mxu0 0.0
    %589 = vmatprep.subr.mxu0 0.0
    %590 = vmatpush1.msra.mxu0 0.0
    %591 = vmatprep.subr.mxu0 0.0
    %592 = vmatpush1.msra.mxu0 0.0
    %593 = vmatprep.subr.mxu0 0.0
    %594 = vmatpush1.msra.mxu0 0.0
    %595 = vmatprep.subr.mxu0 0.0
    %596 = vmatpush1.msra.mxu0 0.0
    %597 = vmatprep.subr.mxu0 0.0
    %598 = vmatpush1.msra.mxu0 %v264
    %599 = vmatprep.subr.mxu0 0.0
    %600 = vmatpush1.msra.mxu0 %v263
    %601 = vmatprep.subr.mxu0 0.0
    %602 = vmatpush1.msra.mxu0 %v262
    %603 = vmatprep.subr.mxu0 0.0
    %604 = vmatpush1.msra.mxu0 %v261
    %605 = vmatprep.subr.mxu0 0.0
    %606 = vmatpush2.msra.mxu0 0.0
    %607 = vmatprep.subr.mxu0 0.0
    %608 = vmatpush2.msra.mxu0 0.0
    %609 = vmatprep.subr.mxu0 0.0
    %610 = vmatpush2.msra.mxu0 0.0
    %611 = vmatprep.subr.mxu0 0.0
    %612 = vmatpush2.msra.mxu0 0.0
    %613 = vmatprep.subr.mxu0 0.0
    %614 = vmatpush2.msra.mxu0 0.0
    %615 = vmatprep.subr.mxu0 0.0
    %616 = vmatpush2.msra.mxu0 0.0
    %617 = vmatprep.subr.mxu0 0.0
    %618 = vmatpush2.msra.mxu0 0.0
    %619 = vmatprep.subr.mxu0 0.0
    %620 = vmatpush2.msra.mxu0 0.0
    %621 = vmatprep.subr.mxu0 0.0
    %622 = vmatpush2.msra.mxu0 0.0
    %623 = vmatprep.subr.mxu0 0.0
    %624 = vmatpush2.msra.mxu0 0.0
    %625 = vmatprep.subr.mxu0 0.0
    %626 = vmatpush2.msra.mxu0 0.0
    %627 = vmatprep.subr.mxu0 0.0
    %628 = vmatpush2.msra.mxu0 0.0
    %629 = vmatprep.subr.mxu0 0.0
    %630 = vmatpush2.msra.mxu0 0.0
    %631 = vmatprep.subr.mxu0 0.0
    %632 = vmatpush2.msra.mxu0 0.0
    %633 = vmatprep.subr.mxu0 0.0
    %634 = vmatpush2.msra.mxu0 0.0
    %635 = vmatprep.subr.mxu0 0.0
    %636 = vmatpush2.msra.mxu0 0.0
    %637 = vmatprep.mubr.f32.mxu0 0.0
    %638 = vmatmul.mubr.f32.gmra.mxu0 %v571
    %v639 = vpop.f32.mrf.mxu0
    %v640 = vadd.f32 0.0, %v639
    %v641 = vpop.f32.mrf.mxu0
    %642 = vdwg.mxu0
    %v643 = vadd.f32 %v236, %v640
    %v644 = vmax.f32 %v643, 0.0
    %645 = vst.msk [vmem:[#allocation2 + $0x20] sm:$0xff] %vm265, %v644
    %v647 = vsel %vm265, %v644, 0
    %649 = vmatprep.subr.mxu0 0.0
    %650 = vmatpush1.msra.mxu0 0.0
    %651 = vmatprep.subr.mxu0 0.0
    %652 = vmatpush1.msra.mxu0 0.0
    %653 = vmatprep.subr.mxu0 0.0
    %654 = vmatpush1.msra.mxu0 0.0
    %655 = vmatprep.subr.mxu0 0.0
    %656 = vmatpush1.msra.mxu0 0.0
    %657 = vmatprep.subr.mxu0 0.0
    %658 = vmatpush1.msra.mxu0 0.0
    %659 = vmatprep.subr.mxu0 0.0
    %660 = vmatpush1.msra.mxu0 0.0
    %661 = vmatprep.subr.mxu0 0.0
    %662 = vmatpush1.msra.mxu0 0.0
    %663 = vmatprep.subr.mxu0 0.0
    %664 = vmatpush1.msra.mxu0 0.0
    %665 = vmatprep.subr.mxu0 0.0
    %666 = vmatpush1.msra.mxu0 0.0
    %667 = vmatprep.subr.mxu0 0.0
    %668 = vmatpush1.msra.mxu0 0.0
    %669 = vmatprep.subr.mxu0 0.0
    %670 = vmatpush1.msra.mxu0 0.0
    %671 = vmatprep.subr.mxu0 0.0
    %672 = vmatpush1.msra.mxu0 0.0
    %673 = vmatprep.subr.mxu0 0.0
    %674 = vmatpush1.msra.mxu0 %v264
    %675 = vmatprep.subr.mxu0 0.0
    %676 = vmatpush1.msra.mxu0 %v263
    %677 = vmatprep.subr.mxu0 0.0
    %678 = vmatpush1.msra.mxu0 %v262
    %679 = vmatprep.subr.mxu0 0.0
    %680 = vmatpush1.msra.mxu0 %v261
    %681 = vmatprep.subr.mxu0 0.0
    %682 = vmatpush2.msra.mxu0 0.0
    %683 = vmatprep.subr.mxu0 0.0
    %684 = vmatpush2.msra.mxu0 0.0
    %685 = vmatprep.subr.mxu0 0.0
    %686 = vmatpush2.msra.mxu0 0.0
    %687 = vmatprep.subr.mxu0 0.0
    %688 = vmatpush2.msra.mxu0 0.0
    %689 = vmatprep.subr.mxu0 0.0
    %690 = vmatpush2.msra.mxu0 0.0
    %691 = vmatprep.subr.mxu0 0.0
    %692 = vmatpush2.msra.mxu0 0.0
    %693 = vmatprep.subr.mxu0 0.0
    %694 = vmatpush2.msra.mxu0 0.0
    %695 = vmatprep.subr.mxu0 0.0
    %696 = vmatpush2.msra.mxu0 0.0
    %697 = vmatprep.subr.mxu0 0.0
    %698 = vmatpush2.msra.mxu0 0.0
    %699 = vmatprep.subr.mxu0 0.0
    %700 = vmatpush2.msra.mxu0 0.0
    %701 = vmatprep.subr.mxu0 0.0
    %702 = vmatpush2.msra.mxu0 0.0
    %703 = vmatprep.subr.mxu0 0.0
    %704 = vmatpush2.msra.mxu0 0.0
    %705 = vmatprep.subr.mxu0 0.0
    %706 = vmatpush2.msra.mxu0 0.0
    %707 = vmatprep.subr.mxu0 0.0
    %708 = vmatpush2.msra.mxu0 0.0
    %709 = vmatprep.subr.mxu0 0.0
    %710 = vmatpush2.msra.mxu0 0.0
    %711 = vmatprep.subr.mxu0 0.0
    %712 = vmatpush2.msra.mxu0 0.0
    %713 = vmatprep.mubr.f32.mxu0 0.0
    %714 = vmatmul.mubr.f32.gmra.mxu0 %v647
    %v715 = vpop.f32.mrf.mxu0
    %v716 = vadd.f32 0.0, %v715
    %v717 = vpop.f32.mrf.mxu0
    %718 = vdwg.mxu0
    %v719 = vadd.f32 %v260, %v716
    %v720 = vmax.f32 %v719, 0.0
    %721 = vst.msk [vmem:[#allocation2 + $0x28] sm:$0xff] %vm265, %v720
    %v723 = vsel %vm265, %v720, 0
    %725 = vmatprep.subr.mxu0 0.0
    %726 = vmatpush1.msra.mxu0 0.0
    %727 = vmatprep.subr.mxu0 0.0
    %728 = vmatpush1.msra.mxu0 0.0
    %729 = vmatprep.subr.mxu0 0.0
    %730 = vmatpush1.msra.mxu0 0.0
    %731 = vmatprep.subr.mxu0 0.0
    %732 = vmatpush1.msra.mxu0 0.0
    %733 = vmatprep.subr.mxu0 0.0
    %734 = vmatpush1.msra.mxu0 0.0
    %735 = vmatprep.subr.mxu0 0.0
    %736 = vmatpush1.msra.mxu0 0.0
    %737 = vmatprep.subr.mxu0 0.0
    %738 = vmatpush1.msra.mxu0 0.0
    %739 = vmatprep.subr.mxu0 0.0
    %740 = vmatpush1.msra.mxu0 0.0
    %741 = vmatprep.subr.mxu0 0.0
    %742 = vmatpush1.msra.mxu0 0.0
    %743 = vmatprep.subr.mxu0 0.0
    %744 = vmatpush1.msra.mxu0 0.0
    %745 = vmatprep.subr.mxu0 0.0
    %746 = vmatpush1.msra.mxu0 0.0
    %747 = vmatprep.subr.mxu0 0.0
    %748 = vmatpush1.msra.mxu0 0.0
    %749 = vmatprep.subr.mxu0 0.0
    %750 = vmatpush1.msra.mxu0 %v264
    %751 = vmatprep.subr.mxu0 0.0
    %752 = vmatpush1.msra.mxu0 %v263
    %753 = vmatprep.subr.mxu0 0.0
    %754 = vmatpush1.msra.mxu0 %v262
    %755 = vmatprep.subr.mxu0 0.0
    %756 = vmatpush1.msra.mxu0 %v261
    %757 = vmatprep.subr.mxu0 0.0
    %758 = vmatpush2.msra.mxu0 0.0
    %759 = vmatprep.subr.mxu0 0.0
    %760 = vmatpush2.msra.mxu0 0.0
    %761 = vmatprep.subr.mxu0 0.0
    %762 = vmatpush2.msra.mxu0 0.0
    %763 = vmatprep.subr.mxu0 0.0
    %764 = vmatpush2.msra.mxu0 0.0
    %765 = vmatprep.subr.mxu0 0.0
    %766 = vmatpush2.msra.mxu0 0.0
    %767 = vmatprep.subr.mxu0 0.0
    %768 = vmatpush2.msra.mxu0 0.0
    %769 = vmatprep.subr.mxu0 0.0
    %770 = vmatpush2.msra.mxu0 0.0
    %771 = vmatprep.subr.mxu0 0.0
    %772 = vmatpush2.msra.mxu0 0.0
    %773 = vmatprep.subr.mxu0 0.0
    %774 = vmatpush2.msra.mxu0 0.0
    %775 = vmatprep.subr.mxu0 0.0
    %776 = vmatpush2.msra.mxu0 0.0
    %777 = vmatprep.subr.mxu0 0.0
    %778 = vmatpush2.msra.mxu0 0.0
    %779 = vmatprep.subr.mxu0 0.0
    %780 = vmatpush2.msra.mxu0 0.0
    %781 = vmatprep.subr.mxu0 0.0
    %782 = vmatpush2.msra.mxu0 0.0
    %783 = vmatprep.subr.mxu0 0.0
    %784 = vmatpush2.msra.mxu0 0.0
    %785 = vmatprep.subr.mxu0 0.0
    %786 = vmatpush2.msra.mxu0 0.0
    %787 = vmatprep.subr.mxu0 0.0
    %788 = vmatpush2.msra.mxu0 0.0
    %789 = vmatprep.mubr.f32.mxu0 0.0
    %790 = vmatmul.mubr.f32.gmra.mxu0 %v723
    %v791 = vpop.f32.mrf.mxu0
    %v792 = vadd.f32 0.0, %v791
    %v793 = vpop.f32.mrf.mxu0
    %794 = vdwg.mxu0
    %v795 = vadd.f32 %v254, %v792
    %v796 = vmax.f32 %v795, 0.0
    %797 = vst.msk [vmem:[#allocation2 + $0x30] sm:$0xff] %vm265, %v796
    %v799 = vsel %vm265, %v796, 0
    %801 = vmatprep.subr.mxu0 0.0
    %802 = vmatpush1.msra.mxu0 0.0
    %803 = vmatprep.subr.mxu0 0.0
    %804 = vmatpush1.msra.mxu0 0.0
    %805 = vmatprep.subr.mxu0 0.0
    %806 = vmatpush1.msra.mxu0 0.0
    %807 = vmatprep.subr.mxu0 0.0
    %808 = vmatpush1.msra.mxu0 0.0
    %809 = vmatprep.subr.mxu0 0.0
    %810 = vmatpush1.msra.mxu0 0.0
    %811 = vmatprep.subr.mxu0 0.0
    %812 = vmatpush1.msra.mxu0 0.0
    %813 = vmatprep.subr.mxu0 0.0
    %814 = vmatpush1.msra.mxu0 0.0
    %815 = vmatprep.subr.mxu0 0.0
    %816 = vmatpush1.msra.mxu0 0.0
    %817 = vmatprep.subr.mxu0 0.0
    %818 = vmatpush1.msra.mxu0 0.0
    %819 = vmatprep.subr.mxu0 0.0
    %820 = vmatpush1.msra.mxu0 0.0
    %821 = vmatprep.subr.mxu0 0.0
    %822 = vmatpush1.msra.mxu0 0.0
    %823 = vmatprep.subr.mxu0 0.0
    %824 = vmatpush1.msra.mxu0 0.0
    %825 = vmatprep.subr.mxu0 0.0
    %826 = vmatpush1.msra.mxu0 %v264
    %827 = vmatprep.subr.mxu0 0.0
    %828 = vmatpush1.msra.mxu0 %v263
    %829 = vmatprep.subr.mxu0 0.0
    %830 = vmatpush1.msra.mxu0 %v262
    %831 = vmatprep.subr.mxu0 0.0
    %832 = vmatpush1.msra.mxu0 %v261
    %833 = vmatprep.subr.mxu0 0.0
    %834 = vmatpush2.msra.mxu0 0.0
    %835 = vmatprep.subr.mxu0 0.0
    %836 = vmatpush2.msra.mxu0 0.0
    %837 = vmatprep.subr.mxu0 0.0
    %838 = vmatpush2.msra.mxu0 0.0
    %839 = vmatprep.subr.mxu0 0.0
    %840 = vmatpush2.msra.mxu0 0.0
    %841 = vmatprep.subr.mxu0 0.0
    %842 = vmatpush2.msra.mxu0 0.0
    %843 = vmatprep.subr.mxu0 0.0
    %844 = vmatpush2.msra.mxu0 0.0
    %845 = vmatprep.subr.mxu0 0.0
    %846 = vmatpush2.msra.mxu0 0.0
    %847 = vmatprep.subr.mxu0 0.0
    %848 = vmatpush2.msra.mxu0 0.0
    %849 = vmatprep.subr.mxu0 0.0
    %850 = vmatpush2.msra.mxu0 0.0
    %851 = vmatprep.subr.mxu0 0.0
    %852 = vmatpush2.msra.mxu0 0.0
    %853 = vmatprep.subr.mxu0 0.0
    %854 = vmatpush2.msra.mxu0 0.0
    %855 = vmatprep.subr.mxu0 0.0
    %856 = vmatpush2.msra.mxu0 0.0
    %857 = vmatprep.subr.mxu0 0.0
    %858 = vmatpush2.msra.mxu0 0.0
    %859 = vmatprep.subr.mxu0 0.0
    %860 = vmatpush2.msra.mxu0 0.0
    %861 = vmatprep.subr.mxu0 0.0
    %862 = vmatpush2.msra.mxu0 0.0
    %863 = vmatprep.subr.mxu0 0.0
    %864 = vmatpush2.msra.mxu0 0.0
    %865 = vmatprep.mubr.f32.mxu0 0.0
    %866 = vmatmul.mubr.f32.gmra.mxu0 %v799
    %v867 = vpop.f32.mrf.mxu0
    %v868 = vadd.f32 0.0, %v867
    %v869 = vpop.f32.mrf.mxu0
    %870 = vdwg.mxu0
    %v871 = vadd.f32 %v256, %v868
    %v872 = vmax.f32 %v871, 0.0
    %873 = vst.msk [vmem:[#allocation2 + $0x38] sm:$0xff] %vm265, %v872
    %vm874 = vcmask 254976
    %875 = vst.msk [vmem:[#allocation14] sm:$0x3] %vm874, %v872
    %v876 = vld [vmem:[#allocation2] sm:$0xff]
    %v877 = vld [vmem:[#allocation2 + $0x8] sm:$0xff]
    %v878 = vld [vmem:[#allocation2 + $0x10] sm:$0xff]
    %v879 = vld [vmem:[#allocation2 + $0x18] sm:$0xff]
    %v880 = vld [vmem:[#allocation2 + $0x20] sm:$0xff]
    %v881 = vld [vmem:[#allocation2 + $0x28] sm:$0xff]
    %v882 = vld [vmem:[#allocation2 + $0x30] sm:$0xff]
    %v883 = vld [vmem:[#allocation2 + $0x38] sm:$0xff]
    %v884 = vld [vmem:[#allocation8] sm:$0xff]
    %v885 = vld [vmem:[#allocation8 + $0x8] sm:$0xff]
    %v886 = vld [vmem:[#allocation8 + $0x10] sm:$0xff]
    %v887 = vld [vmem:[#allocation8 + $0x18] sm:$0xff]
    %v888 = vld [vmem:[#allocation11] sm:$0x1]
    %v890 = vlaneseq
    %v891 = vshrl.u32 %v890, 7
    %v892 = vsub.s32 0, %v891
    %v893 = vrot.slane %v888, %v892
    %v896 = vsel %vm265, %v876, 0
    %v899 = vsel %vm265, %v877, 0
    %v902 = vsel %vm265, %v878, 0
    %v905 = vsel %vm265, %v879, 0
    %v908 = vsel %vm265, %v880, 0
    %v911 = vsel %vm265, %v881, 0
    %v914 = vsel %vm265, %v882, 0
    %v917 = vsel %vm265, %v883, 0
    %919 = vmatprep.subr.mxu0 0.0
    %920 = vmatpush1.msra.mxu0 0.0
    %921 = vmatprep.subr.mxu0 0.0
    %922 = vmatpush1.msra.mxu0 0.0
    %923 = vmatprep.subr.mxu0 0.0
    %924 = vmatpush1.msra.mxu0 0.0
    %925 = vmatprep.subr.mxu0 0.0
    %926 = vmatpush1.msra.mxu0 0.0
    %927 = vmatprep.subr.mxu0 0.0
    %928 = vmatpush1.msra.mxu0 0.0
    %929 = vmatprep.subr.mxu0 0.0
    %930 = vmatpush1.msra.mxu0 0.0
    %931 = vmatprep.subr.mxu0 0.0
    %932 = vmatpush1.msra.mxu0 0.0
    %933 = vmatprep.subr.mxu0 0.0
    %934 = vmatpush1.msra.mxu0 0.0
    %935 = vmatprep.subr.mxu0 0.0
    %936 = vmatpush1.msra.mxu0 0.0
    %937 = vmatprep.subr.mxu0 0.0
    %938 = vmatpush1.msra.mxu0 0.0
    %939 = vmatprep.subr.mxu0 0.0
    %940 = vmatpush1.msra.mxu0 0.0
    %941 = vmatprep.subr.mxu0 0.0
    %942 = vmatpush1.msra.mxu0 0.0
    %943 = vmatprep.subr.mxu0 0.0
    %944 = vmatpush1.msra.mxu0 %v887
    %945 = vmatprep.subr.mxu0 0.0
    %946 = vmatpush1.msra.mxu0 %v886
    %947 = vmatprep.subr.mxu0 0.0
    %948 = vmatpush1.msra.mxu0 %v885
    %949 = vmatprep.subr.mxu0 0.0
    %950 = vmatpush1.msra.mxu0 %v884
    %951 = vmatprep.subr.mxu0 0.0
    %952 = vmatpush2.msra.mxu0 0.0
    %953 = vmatprep.subr.mxu0 0.0
    %954 = vmatpush2.msra.mxu0 0.0
    %955 = vmatprep.subr.mxu0 0.0
    %956 = vmatpush2.msra.mxu0 0.0
    %957 = vmatprep.subr.mxu0 0.0
    %958 = vmatpush2.msra.mxu0 0.0
    %959 = vmatprep.subr.mxu0 0.0
    %960 = vmatpush2.msra.mxu0 0.0
    %961 = vmatprep.subr.mxu0 0.0
    %962 = vmatpush2.msra.mxu0 0.0
    %963 = vmatprep.subr.mxu0 0.0
    %964 = vmatpush2.msra.mxu0 0.0
    %965 = vmatprep.subr.mxu0 0.0
    %966 = vmatpush2.msra.mxu0 0.0
    %967 = vmatprep.subr.mxu0 0.0
    %968 = vmatpush2.msra.mxu0 0.0
    %969 = vmatprep.subr.mxu0 0.0
    %970 = vmatpush2.msra.mxu0 0.0
    %971 = vmatprep.subr.mxu0 0.0
    %972 = vmatpush2.msra.mxu0 0.0
    %973 = vmatprep.subr.mxu0 0.0
    %974 = vmatpush2.msra.mxu0 0.0
    %975 = vmatprep.subr.mxu0 0.0
    %976 = vmatpush2.msra.mxu0 0.0
    %977 = vmatprep.subr.mxu0 0.0
    %978 = vmatpush2.msra.mxu0 0.0
    %979 = vmatprep.subr.mxu0 0.0
    %980 = vmatpush2.msra.mxu0 0.0
    %981 = vmatprep.subr.mxu0 0.0
    %982 = vmatpush2.msra.mxu0 0.0
    %983 = vmatprep.mubr.f32.mxu0 0.0
    %984 = vmatmul.mubr.f32.gmra.mxu0 %v896
    %v985 = vpop.f32.mrf.mxu0
    %v986 = vadd.f32 %v893, %v985
    %v987 = vpop.f32.mrf.mxu0
    %988 = vmatprep.mubr.f32.mxu0 0.0
    %989 = vmatmul.mubr.f32.gmra.mxu0 %v899
    %v990 = vpop.f32.mrf.mxu0
    %v991 = vadd.f32 %v893, %v990
    %v992 = vpop.f32.mrf.mxu0
    %993 = vmatprep.mubr.f32.mxu0 0.0
    %994 = vmatmul.mubr.f32.gmra.mxu0 %v902
    %v995 = vpop.f32.mrf.mxu0
    %v996 = vadd.f32 %v893, %v995
    %v997 = vpop.f32.mrf.mxu0
    %998 = vmatprep.mubr.f32.mxu0 0.0
    %999 = vmatmul.mubr.f32.gmra.mxu0 %v905
    %v1000 = vpop.f32.mrf.mxu0
    %v1001 = vadd.f32 %v893, %v1000
    %v1002 = vpop.f32.mrf.mxu0
    %1003 = vmatprep.mubr.f32.mxu0 0.0
    %1004 = vmatmul.mubr.f32.gmra.mxu0 %v908
    %v1005 = vpop.f32.mrf.mxu0
    %v1006 = vadd.f32 %v893, %v1005
    %v1007 = vpop.f32.mrf.mxu0
    %1008 = vmatprep.mubr.f32.mxu0 0.0
    %1009 = vmatmul.mubr.f32.gmra.mxu0 %v911
    %v1010 = vpop.f32.mrf.mxu0
    %v1011 = vadd.f32 %v893, %v1010
    %v1012 = vpop.f32.mrf.mxu0
    %1013 = vmatprep.mubr.f32.mxu0 0.0
    %1014 = vmatmul.mubr.f32.gmra.mxu0 %v914
    %v1015 = vpop.f32.mrf.mxu0
    %v1016 = vadd.f32 %v893, %v1015
    %v1017 = vpop.f32.mrf.mxu0
    %1018 = vmatprep.mubr.f32.mxu0 0.0
    %1019 = vmatmul.mubr.f32.gmra.mxu0 %v917
    %v1020 = vpop.f32.mrf.mxu0
    %v1021 = vadd.f32 %v893, %v1020
    %v1022 = vpop.f32.mrf.mxu0
    %1023 = vdwg.mxu0
    %v1024 = vld [vmem:[#allocation9] sm:$0xff]
    %v1025 = vld [vmem:[#allocation9 + $0x8] sm:$0xff]
    %v1026 = vld [vmem:[#allocation9 + $0x10] sm:$0xff]
    %v1027 = vld [vmem:[#allocation9 + $0x18] sm:$0xff]
    %1028 = vmatprep.subr.mxu0 0.0
    %1029 = vmatpush1.msra.mxu0 0.0
    %1030 = vmatprep.subr.mxu0 0.0
    %1031 = vmatpush1.msra.mxu0 0.0
    %1032 = vmatprep.subr.mxu0 0.0
    %1033 = vmatpush1.msra.mxu0 0.0
    %1034 = vmatprep.subr.mxu0 0.0
    %1035 = vmatpush1.msra.mxu0 0.0
    %1036 = vmatprep.subr.mxu0 0.0
    %1037 = vmatpush1.msra.mxu0 0.0
    %1038 = vmatprep.subr.mxu0 0.0
    %1039 = vmatpush1.msra.mxu0 0.0
    %1040 = vmatprep.subr.mxu0 0.0
    %1041 = vmatpush1.msra.mxu0 0.0
    %1042 = vmatprep.subr.mxu0 0.0
    %1043 = vmatpush1.msra.mxu0 0.0
    %1044 = vmatprep.subr.mxu0 0.0
    %1045 = vmatpush1.msra.mxu0 0.0
    %1046 = vmatprep.subr.mxu0 0.0
    %1047 = vmatpush1.msra.mxu0 0.0
    %1048 = vmatprep.subr.mxu0 0.0
    %1049 = vmatpush1.msra.mxu0 0.0
    %1050 = vmatprep.subr.mxu0 0.0
    %1051 = vmatpush1.msra.mxu0 0.0
    %1052 = vmatprep.subr.mxu0 0.0
    %1053 = vmatpush1.msra.mxu0 %v1027
    %1054 = vmatprep.subr.mxu0 0.0
    %1055 = vmatpush1.msra.mxu0 %v1026
    %1056 = vmatprep.subr.mxu0 0.0
    %1057 = vmatpush1.msra.mxu0 %v1025
    %1058 = vmatprep.subr.mxu0 0.0
    %1059 = vmatpush1.msra.mxu0 %v1024
    %1060 = vmatprep.subr.mxu0 0.0
    %1061 = vmatpush2.msra.mxu0 0.0
    %1062 = vmatprep.subr.mxu0 0.0
    %1063 = vmatpush2.msra.mxu0 0.0
    %1064 = vmatprep.subr.mxu0 0.0
    %1065 = vmatpush2.msra.mxu0 0.0
    %1066 = vmatprep.subr.mxu0 0.0
    %1067 = vmatpush2.msra.mxu0 0.0
    %1068 = vmatprep.subr.mxu0 0.0
    %1069 = vmatpush2.msra.mxu0 0.0
    %1070 = vmatprep.subr.mxu0 0.0
    %1071 = vmatpush2.msra.mxu0 0.0
    %1072 = vmatprep.subr.mxu0 0.0
    %1073 = vmatpush2.msra.mxu0 0.0
    %1074 = vmatprep.subr.mxu0 0.0
    %1075 = vmatpush2.msra.mxu0 0.0
    %1076 = vmatprep.subr.mxu0 0.0
    %1077 = vmatpush2.msra.mxu0 0.0
    %1078 = vmatprep.subr.mxu0 0.0
    %1079 = vmatpush2.msra.mxu0 0.0
    %1080 = vmatprep.subr.mxu0 0.0
    %1081 = vmatpush2.msra.mxu0 0.0
    %1082 = vmatprep.subr.mxu0 0.0
    %1083 = vmatpush2.msra.mxu0 0.0
    %1084 = vmatprep.subr.mxu0 0.0
    %1085 = vmatpush2.msra.mxu0 0.0
    %1086 = vmatprep.subr.mxu0 0.0
    %1087 = vmatpush2.msra.mxu0 0.0
    %1088 = vmatprep.subr.mxu0 0.0
    %1089 = vmatpush2.msra.mxu0 0.0
    %1090 = vmatprep.subr.mxu0 0.0
    %1091 = vmatpush2.msra.mxu0 0.0
    %1092 = vmatprep.mubr.f32.mxu0 0.0
    %1093 = vmatmul.mubr.f32.gmra.mxu0 %v267
    %v1094 = vpop.f32.mrf.mxu0
    %v1095 = vadd.f32 0.0, %v1094
    %v1096 = vpop.f32.mrf.mxu0
    %1097 = vdwg.mxu0
    %v1098 = vadd.f32 %v986, %v1095
    %v1099 = vmax.f32 %v1098, 0.0
    %1100 = vst.msk [vmem:[#allocation2] sm:$0xff] %vm265, %v1099
    %v1102 = vsel %vm265, %v1099, 0
    %1104 = vmatprep.subr.mxu0 0.0
    %1105 = vmatpush1.msra.mxu0 0.0
    %1106 = vmatprep.subr.mxu0 0.0
    %1107 = vmatpush1.msra.mxu0 0.0
    %1108 = vmatprep.subr.mxu0 0.0
    %1109 = vmatpush1.msra.mxu0 0.0
    %1110 = vmatprep.subr.mxu0 0.0
    %1111 = vmatpush1.msra.mxu0 0.0
    %1112 = vmatprep.subr.mxu0 0.0
    %1113 = vmatpush1.msra.mxu0 0.0
    %1114 = vmatprep.subr.mxu0 0.0
    %1115 = vmatpush1.msra.mxu0 0.0
    %1116 = vmatprep.subr.mxu0 0.0
    %1117 = vmatpush1.msra.mxu0 0.0
    %1118 = vmatprep.subr.mxu0 0.0
    %1119 = vmatpush1.msra.mxu0 0.0
    %1120 = vmatprep.subr.mxu0 0.0
    %1121 = vmatpush1.msra.mxu0 0.0
    %1122 = vmatprep.subr.mxu0 0.0
    %1123 = vmatpush1.msra.mxu0 0.0
    %1124 = vmatprep.subr.mxu0 0.0
    %1125 = vmatpush1.msra.mxu0 0.0
    %1126 = vmatprep.subr.mxu0 0.0
    %1127 = vmatpush1.msra.mxu0 0.0
    %1128 = vmatprep.subr.mxu0 0.0
    %1129 = vmatpush1.msra.mxu0 %v1027
    %1130 = vmatprep.subr.mxu0 0.0
    %1131 = vmatpush1.msra.mxu0 %v1026
    %1132 = vmatprep.subr.mxu0 0.0
    %1133 = vmatpush1.msra.mxu0 %v1025
    %1134 = vmatprep.subr.mxu0 0.0
    %1135 = vmatpush1.msra.mxu0 %v1024
    %1136 = vmatprep.subr.mxu0 0.0
    %1137 = vmatpush2.msra.mxu0 0.0
    %1138 = vmatprep.subr.mxu0 0.0
    %1139 = vmatpush2.msra.mxu0 0.0
    %1140 = vmatprep.subr.mxu0 0.0
    %1141 = vmatpush2.msra.mxu0 0.0
    %1142 = vmatprep.subr.mxu0 0.0
    %1143 = vmatpush2.msra.mxu0 0.0
    %1144 = vmatprep.subr.mxu0 0.0
    %1145 = vmatpush2.msra.mxu0 0.0
    %1146 = vmatprep.subr.mxu0 0.0
    %1147 = vmatpush2.msra.mxu0 0.0
    %1148 = vmatprep.subr.mxu0 0.0
    %1149 = vmatpush2.msra.mxu0 0.0
    %1150 = vmatprep.subr.mxu0 0.0
    %1151 = vmatpush2.msra.mxu0 0.0
    %1152 = vmatprep.subr.mxu0 0.0
    %1153 = vmatpush2.msra.mxu0 0.0
    %1154 = vmatprep.subr.mxu0 0.0
    %1155 = vmatpush2.msra.mxu0 0.0
    %1156 = vmatprep.subr.mxu0 0.0
    %1157 = vmatpush2.msra.mxu0 0.0
    %1158 = vmatprep.subr.mxu0 0.0
    %1159 = vmatpush2.msra.mxu0 0.0
    %1160 = vmatprep.subr.mxu0 0.0
    %1161 = vmatpush2.msra.mxu0 0.0
    %1162 = vmatprep.subr.mxu0 0.0
    %1163 = vmatpush2.msra.mxu0 0.0
    %1164 = vmatprep.subr.mxu0 0.0
    %1165 = vmatpush2.msra.mxu0 0.0
    %1166 = vmatprep.subr.mxu0 0.0
    %1167 = vmatpush2.msra.mxu0 0.0
    %1168 = vmatprep.mubr.f32.mxu0 0.0
    %1169 = vmatmul.mubr.f32.gmra.mxu0 %v1102
    %v1170 = vpop.f32.mrf.mxu0
    %v1171 = vadd.f32 0.0, %v1170
    %v1172 = vpop.f32.mrf.mxu0
    %1173 = vdwg.mxu0
    %v1174 = vadd.f32 %v991, %v1171
    %v1175 = vmax.f32 %v1174, 0.0
    %1176 = vst.msk [vmem:[#allocation2 + $0x8] sm:$0xff] %vm265, %v1175
    %v1178 = vsel %vm265, %v1175, 0
    %1180 = vmatprep.subr.mxu0 0.0
    %1181 = vmatpush1.msra.mxu0 0.0
    %1182 = vmatprep.subr.mxu0 0.0
    %1183 = vmatpush1.msra.mxu0 0.0
    %1184 = vmatprep.subr.mxu0 0.0
    %1185 = vmatpush1.msra.mxu0 0.0
    %1186 = vmatprep.subr.mxu0 0.0
    %1187 = vmatpush1.msra.mxu0 0.0
    %1188 = vmatprep.subr.mxu0 0.0
    %1189 = vmatpush1.msra.mxu0 0.0
    %1190 = vmatprep.subr.mxu0 0.0
    %1191 = vmatpush1.msra.mxu0 0.0
    %1192 = vmatprep.subr.mxu0 0.0
    %1193 = vmatpush1.msra.mxu0 0.0
    %1194 = vmatprep.subr.mxu0 0.0
    %1195 = vmatpush1.msra.mxu0 0.0
    %1196 = vmatprep.subr.mxu0 0.0
    %1197 = vmatpush1.msra.mxu0 0.0
    %1198 = vmatprep.subr.mxu0 0.0
    %1199 = vmatpush1.msra.mxu0 0.0
    %1200 = vmatprep.subr.mxu0 0.0
    %1201 = vmatpush1.msra.mxu0 0.0
    %1202 = vmatprep.subr.mxu0 0.0
    %1203 = vmatpush1.msra.mxu0 0.0
    %1204 = vmatprep.subr.mxu0 0.0
    %1205 = vmatpush1.msra.mxu0 %v1027
    %1206 = vmatprep.subr.mxu0 0.0
    %1207 = vmatpush1.msra.mxu0 %v1026
    %1208 = vmatprep.subr.mxu0 0.0
    %1209 = vmatpush1.msra.mxu0 %v1025
    %1210 = vmatprep.subr.mxu0 0.0
    %1211 = vmatpush1.msra.mxu0 %v1024
    %1212 = vmatprep.subr.mxu0 0.0
    %1213 = vmatpush2.msra.mxu0 0.0
    %1214 = vmatprep.subr.mxu0 0.0
    %1215 = vmatpush2.msra.mxu0 0.0
    %1216 = vmatprep.subr.mxu0 0.0
    %1217 = vmatpush2.msra.mxu0 0.0
    %1218 = vmatprep.subr.mxu0 0.0
    %1219 = vmatpush2.msra.mxu0 0.0
    %1220 = vmatprep.subr.mxu0 0.0
    %1221 = vmatpush2.msra.mxu0 0.0
    %1222 = vmatprep.subr.mxu0 0.0
    %1223 = vmatpush2.msra.mxu0 0.0
    %1224 = vmatprep.subr.mxu0 0.0
    %1225 = vmatpush2.msra.mxu0 0.0
    %1226 = vmatprep.subr.mxu0 0.0
    %1227 = vmatpush2.msra.mxu0 0.0
    %1228 = vmatprep.subr.mxu0 0.0
    %1229 = vmatpush2.msra.mxu0 0.0
    %1230 = vmatprep.subr.mxu0 0.0
    %1231 = vmatpush2.msra.mxu0 0.0
    %1232 = vmatprep.subr.mxu0 0.0
    %1233 = vmatpush2.msra.mxu0 0.0
    %1234 = vmatprep.subr.mxu0 0.0
    %1235 = vmatpush2.msra.mxu0 0.0
    %1236 = vmatprep.subr.mxu0 0.0
    %1237 = vmatpush2.msra.mxu0 0.0
    %1238 = vmatprep.subr.mxu0 0.0
    %1239 = vmatpush2.msra.mxu0 0.0
    %1240 = vmatprep.subr.mxu0 0.0
    %1241 = vmatpush2.msra.mxu0 0.0
    %1242 = vmatprep.subr.mxu0 0.0
    %1243 = vmatpush2.msra.mxu0 0.0
    %1244 = vmatprep.mubr.f32.mxu0 0.0
    %1245 = vmatmul.mubr.f32.gmra.mxu0 %v1178
    %v1246 = vpop.f32.mrf.mxu0
    %v1247 = vadd.f32 0.0, %v1246
    %v1248 = vpop.f32.mrf.mxu0
    %1249 = vdwg.mxu0
    %v1250 = vadd.f32 %v996, %v1247
    %v1251 = vmax.f32 %v1250, 0.0
    %1252 = vst.msk [vmem:[#allocation2 + $0x10] sm:$0xff] %vm265, %v1251
    %v1254 = vsel %vm265, %v1251, 0
    %1256 = vmatprep.subr.mxu0 0.0
    %1257 = vmatpush1.msra.mxu0 0.0
    %1258 = vmatprep.subr.mxu0 0.0
    %1259 = vmatpush1.msra.mxu0 0.0
    %1260 = vmatprep.subr.mxu0 0.0
    %1261 = vmatpush1.msra.mxu0 0.0
    %1262 = vmatprep.subr.mxu0 0.0
    %1263 = vmatpush1.msra.mxu0 0.0
    %1264 = vmatprep.subr.mxu0 0.0
    %1265 = vmatpush1.msra.mxu0 0.0
    %1266 = vmatprep.subr.mxu0 0.0
    %1267 = vmatpush1.msra.mxu0 0.0
    %1268 = vmatprep.subr.mxu0 0.0
    %1269 = vmatpush1.msra.mxu0 0.0
    %1270 = vmatprep.subr.mxu0 0.0
    %1271 = vmatpush1.msra.mxu0 0.0
    %1272 = vmatprep.subr.mxu0 0.0
    %1273 = vmatpush1.msra.mxu0 0.0
    %1274 = vmatprep.subr.mxu0 0.0
    %1275 = vmatpush1.msra.mxu0 0.0
    %1276 = vmatprep.subr.mxu0 0.0
    %1277 = vmatpush1.msra.mxu0 0.0
    %1278 = vmatprep.subr.mxu0 0.0
    %1279 = vmatpush1.msra.mxu0 0.0
    %1280 = vmatprep.subr.mxu0 0.0
    %1281 = vmatpush1.msra.mxu0 %v1027
    %1282 = vmatprep.subr.mxu0 0.0
    %1283 = vmatpush1.msra.mxu0 %v1026
    %1284 = vmatprep.subr.mxu0 0.0
    %1285 = vmatpush1.msra.mxu0 %v1025
    %1286 = vmatprep.subr.mxu0 0.0
    %1287 = vmatpush1.msra.mxu0 %v1024
    %1288 = vmatprep.subr.mxu0 0.0
    %1289 = vmatpush2.msra.mxu0 0.0
    %1290 = vmatprep.subr.mxu0 0.0
    %1291 = vmatpush2.msra.mxu0 0.0
    %1292 = vmatprep.subr.mxu0 0.0
    %1293 = vmatpush2.msra.mxu0 0.0
    %1294 = vmatprep.subr.mxu0 0.0
    %1295 = vmatpush2.msra.mxu0 0.0
    %1296 = vmatprep.subr.mxu0 0.0
    %1297 = vmatpush2.msra.mxu0 0.0
    %1298 = vmatprep.subr.mxu0 0.0
    %1299 = vmatpush2.msra.mxu0 0.0
    %1300 = vmatprep.subr.mxu0 0.0
    %1301 = vmatpush2.msra.mxu0 0.0
    %1302 = vmatprep.subr.mxu0 0.0
    %1303 = vmatpush2.msra.mxu0 0.0
    %1304 = vmatprep.subr.mxu0 0.0
    %1305 = vmatpush2.msra.mxu0 0.0
    %1306 = vmatprep.subr.mxu0 0.0
    %1307 = vmatpush2.msra.mxu0 0.0
    %1308 = vmatprep.subr.mxu0 0.0
    %1309 = vmatpush2.msra.mxu0 0.0
    %1310 = vmatprep.subr.mxu0 0.0
    %1311 = vmatpush2.msra.mxu0 0.0
    %1312 = vmatprep.subr.mxu0 0.0
    %1313 = vmatpush2.msra.mxu0 0.0
    %1314 = vmatprep.subr.mxu0 0.0
    %1315 = vmatpush2.msra.mxu0 0.0
    %1316 = vmatprep.subr.mxu0 0.0
    %1317 = vmatpush2.msra.mxu0 0.0
    %1318 = vmatprep.subr.mxu0 0.0
    %1319 = vmatpush2.msra.mxu0 0.0
    %1320 = vmatprep.mubr.f32.mxu0 0.0
    %1321 = vmatmul.mubr.f32.gmra.mxu0 %v1254
    %v1322 = vpop.f32.mrf.mxu0
    %v1323 = vadd.f32 0.0, %v1322
    %v1324 = vpop.f32.mrf.mxu0
    %1325 = vdwg.mxu0
    %v1326 = vadd.f32 %v1001, %v1323
    %v1327 = vmax.f32 %v1326, 0.0
    %1328 = vst.msk [vmem:[#allocation2 + $0x18] sm:$0xff] %vm265, %v1327
    %v1330 = vsel %vm265, %v1327, 0
    %1332 = vmatprep.subr.mxu0 0.0
    %1333 = vmatpush1.msra.mxu0 0.0
    %1334 = vmatprep.subr.mxu0 0.0
    %1335 = vmatpush1.msra.mxu0 0.0
    %1336 = vmatprep.subr.mxu0 0.0
    %1337 = vmatpush1.msra.mxu0 0.0
    %1338 = vmatprep.subr.mxu0 0.0
    %1339 = vmatpush1.msra.mxu0 0.0
    %1340 = vmatprep.subr.mxu0 0.0
    %1341 = vmatpush1.msra.mxu0 0.0
    %1342 = vmatprep.subr.mxu0 0.0
    %1343 = vmatpush1.msra.mxu0 0.0
    %1344 = vmatprep.subr.mxu0 0.0
    %1345 = vmatpush1.msra.mxu0 0.0
    %1346 = vmatprep.subr.mxu0 0.0
    %1347 = vmatpush1.msra.mxu0 0.0
    %1348 = vmatprep.subr.mxu0 0.0
    %1349 = vmatpush1.msra.mxu0 0.0
    %1350 = vmatprep.subr.mxu0 0.0
    %1351 = vmatpush1.msra.mxu0 0.0
    %1352 = vmatprep.subr.mxu0 0.0
    %1353 = vmatpush1.msra.mxu0 0.0
    %1354 = vmatprep.subr.mxu0 0.0
    %1355 = vmatpush1.msra.mxu0 0.0
    %1356 = vmatprep.subr.mxu0 0.0
    %1357 = vmatpush1.msra.mxu0 %v1027
    %1358 = vmatprep.subr.mxu0 0.0
    %1359 = vmatpush1.msra.mxu0 %v1026
    %1360 = vmatprep.subr.mxu0 0.0
    %1361 = vmatpush1.msra.mxu0 %v1025
    %1362 = vmatprep.subr.mxu0 0.0
    %1363 = vmatpush1.msra.mxu0 %v1024
    %1364 = vmatprep.subr.mxu0 0.0
    %1365 = vmatpush2.msra.mxu0 0.0
    %1366 = vmatprep.subr.mxu0 0.0
    %1367 = vmatpush2.msra.mxu0 0.0
    %1368 = vmatprep.subr.mxu0 0.0
    %1369 = vmatpush2.msra.mxu0 0.0
    %1370 = vmatprep.subr.mxu0 0.0
    %1371 = vmatpush2.msra.mxu0 0.0
    %1372 = vmatprep.subr.mxu0 0.0
    %1373 = vmatpush2.msra.mxu0 0.0
    %1374 = vmatprep.subr.mxu0 0.0
    %1375 = vmatpush2.msra.mxu0 0.0
    %1376 = vmatprep.subr.mxu0 0.0
    %1377 = vmatpush2.msra.mxu0 0.0
    %1378 = vmatprep.subr.mxu0 0.0
    %1379 = vmatpush2.msra.mxu0 0.0
    %1380 = vmatprep.subr.mxu0 0.0
    %1381 = vmatpush2.msra.mxu0 0.0
    %1382 = vmatprep.subr.mxu0 0.0
    %1383 = vmatpush2.msra.mxu0 0.0
    %1384 = vmatprep.subr.mxu0 0.0
    %1385 = vmatpush2.msra.mxu0 0.0
    %1386 = vmatprep.subr.mxu0 0.0
    %1387 = vmatpush2.msra.mxu0 0.0
    %1388 = vmatprep.subr.mxu0 0.0
    %1389 = vmatpush2.msra.mxu0 0.0
    %1390 = vmatprep.subr.mxu0 0.0
    %1391 = vmatpush2.msra.mxu0 0.0
    %1392 = vmatprep.subr.mxu0 0.0
    %1393 = vmatpush2.msra.mxu0 0.0
    %1394 = vmatprep.subr.mxu0 0.0
    %1395 = vmatpush2.msra.mxu0 0.0
    %1396 = vmatprep.mubr.f32.mxu0 0.0
    %1397 = vmatmul.mubr.f32.gmra.mxu0 %v1330
    %v1398 = vpop.f32.mrf.mxu0
    %v1399 = vadd.f32 0.0, %v1398
    %v1400 = vpop.f32.mrf.mxu0
    %1401 = vdwg.mxu0
    %v1402 = vadd.f32 %v1006, %v1399
    %v1403 = vmax.f32 %v1402, 0.0
    %1404 = vst.msk [vmem:[#allocation2 + $0x20] sm:$0xff] %vm265, %v1403
    %v1406 = vsel %vm265, %v1403, 0
    %1408 = vmatprep.subr.mxu0 0.0
    %1409 = vmatpush1.msra.mxu0 0.0
    %1410 = vmatprep.subr.mxu0 0.0
    %1411 = vmatpush1.msra.mxu0 0.0
    %1412 = vmatprep.subr.mxu0 0.0
    %1413 = vmatpush1.msra.mxu0 0.0
    %1414 = vmatprep.subr.mxu0 0.0
    %1415 = vmatpush1.msra.mxu0 0.0
    %1416 = vmatprep.subr.mxu0 0.0
    %1417 = vmatpush1.msra.mxu0 0.0
    %1418 = vmatprep.subr.mxu0 0.0
    %1419 = vmatpush1.msra.mxu0 0.0
    %1420 = vmatprep.subr.mxu0 0.0
    %1421 = vmatpush1.msra.mxu0 0.0
    %1422 = vmatprep.subr.mxu0 0.0
    %1423 = vmatpush1.msra.mxu0 0.0
    %1424 = vmatprep.subr.mxu0 0.0
    %1425 = vmatpush1.msra.mxu0 0.0
    %1426 = vmatprep.subr.mxu0 0.0
    %1427 = vmatpush1.msra.mxu0 0.0
    %1428 = vmatprep.subr.mxu0 0.0
    %1429 = vmatpush1.msra.mxu0 0.0
    %1430 = vmatprep.subr.mxu0 0.0
    %1431 = vmatpush1.msra.mxu0 0.0
    %1432 = vmatprep.subr.mxu0 0.0
    %1433 = vmatpush1.msra.mxu0 %v1027
    %1434 = vmatprep.subr.mxu0 0.0
    %1435 = vmatpush1.msra.mxu0 %v1026
    %1436 = vmatprep.subr.mxu0 0.0
    %1437 = vmatpush1.msra.mxu0 %v1025
    %1438 = vmatprep.subr.mxu0 0.0
    %1439 = vmatpush1.msra.mxu0 %v1024
    %1440 = vmatprep.subr.mxu0 0.0
    %1441 = vmatpush2.msra.mxu0 0.0
    %1442 = vmatprep.subr.mxu0 0.0
    %1443 = vmatpush2.msra.mxu0 0.0
    %1444 = vmatprep.subr.mxu0 0.0
    %1445 = vmatpush2.msra.mxu0 0.0
    %1446 = vmatprep.subr.mxu0 0.0
    %1447 = vmatpush2.msra.mxu0 0.0
    %1448 = vmatprep.subr.mxu0 0.0
    %1449 = vmatpush2.msra.mxu0 0.0
    %1450 = vmatprep.subr.mxu0 0.0
    %1451 = vmatpush2.msra.mxu0 0.0
    %1452 = vmatprep.subr.mxu0 0.0
    %1453 = vmatpush2.msra.mxu0 0.0
    %1454 = vmatprep.subr.mxu0 0.0
    %1455 = vmatpush2.msra.mxu0 0.0
    %1456 = vmatprep.subr.mxu0 0.0
    %1457 = vmatpush2.msra.mxu0 0.0
    %1458 = vmatprep.subr.mxu0 0.0
    %1459 = vmatpush2.msra.mxu0 0.0
    %1460 = vmatprep.subr.mxu0 0.0
    %1461 = vmatpush2.msra.mxu0 0.0
    %1462 = vmatprep.subr.mxu0 0.0
    %1463 = vmatpush2.msra.mxu0 0.0
    %1464 = vmatprep.subr.mxu0 0.0
    %1465 = vmatpush2.msra.mxu0 0.0
    %1466 = vmatprep.subr.mxu0 0.0
    %1467 = vmatpush2.msra.mxu0 0.0
    %1468 = vmatprep.subr.mxu0 0.0
    %1469 = vmatpush2.msra.mxu0 0.0
    %1470 = vmatprep.subr.mxu0 0.0
    %1471 = vmatpush2.msra.mxu0 0.0
    %1472 = vmatprep.mubr.f32.mxu0 0.0
    %1473 = vmatmul.mubr.f32.gmra.mxu0 %v1406
    %v1474 = vpop.f32.mrf.mxu0
    %v1475 = vadd.f32 0.0, %v1474
    %v1476 = vpop.f32.mrf.mxu0
    %1477 = vdwg.mxu0
    %v1478 = vadd.f32 %v1011, %v1475
    %v1479 = vmax.f32 %v1478, 0.0
    %1480 = vst.msk [vmem:[#allocation2 + $0x28] sm:$0xff] %vm265, %v1479
    %v1482 = vsel %vm265, %v1479, 0
    %1484 = vmatprep.subr.mxu0 0.0
    %1485 = vmatpush1.msra.mxu0 0.0
    %1486 = vmatprep.subr.mxu0 0.0
    %1487 = vmatpush1.msra.mxu0 0.0
    %1488 = vmatprep.subr.mxu0 0.0
    %1489 = vmatpush1.msra.mxu0 0.0
    %1490 = vmatprep.subr.mxu0 0.0
    %1491 = vmatpush1.msra.mxu0 0.0
    %1492 = vmatprep.subr.mxu0 0.0
    %1493 = vmatpush1.msra.mxu0 0.0
    %1494 = vmatprep.subr.mxu0 0.0
    %1495 = vmatpush1.msra.mxu0 0.0
    %1496 = vmatprep.subr.mxu0 0.0
    %1497 = vmatpush1.msra.mxu0 0.0
    %1498 = vmatprep.subr.mxu0 0.0
    %1499 = vmatpush1.msra.mxu0 0.0
    %1500 = vmatprep.subr.mxu0 0.0
    %1501 = vmatpush1.msra.mxu0 0.0
    %1502 = vmatprep.subr.mxu0 0.0
    %1503 = vmatpush1.msra.mxu0 0.0
    %1504 = vmatprep.subr.mxu0 0.0
    %1505 = vmatpush1.msra.mxu0 0.0
    %1506 = vmatprep.subr.mxu0 0.0
    %1507 = vmatpush1.msra.mxu0 0.0
    %1508 = vmatprep.subr.mxu0 0.0
    %1509 = vmatpush1.msra.mxu0 %v1027
    %1510 = vmatprep.subr.mxu0 0.0
    %1511 = vmatpush1.msra.mxu0 %v1026
    %1512 = vmatprep.subr.mxu0 0.0
    %1513 = vmatpush1.msra.mxu0 %v1025
    %1514 = vmatprep.subr.mxu0 0.0
    %1515 = vmatpush1.msra.mxu0 %v1024
    %1516 = vmatprep.subr.mxu0 0.0
    %1517 = vmatpush2.msra.mxu0 0.0
    %1518 = vmatprep.subr.mxu0 0.0
    %1519 = vmatpush2.msra.mxu0 0.0
    %1520 = vmatprep.subr.mxu0 0.0
    %1521 = vmatpush2.msra.mxu0 0.0
    %1522 = vmatprep.subr.mxu0 0.0
    %1523 = vmatpush2.msra.mxu0 0.0
    %1524 = vmatprep.subr.mxu0 0.0
    %1525 = vmatpush2.msra.mxu0 0.0
    %1526 = vmatprep.subr.mxu0 0.0
    %1527 = vmatpush2.msra.mxu0 0.0
    %1528 = vmatprep.subr.mxu0 0.0
    %1529 = vmatpush2.msra.mxu0 0.0
    %1530 = vmatprep.subr.mxu0 0.0
    %1531 = vmatpush2.msra.mxu0 0.0
    %1532 = vmatprep.subr.mxu0 0.0
    %1533 = vmatpush2.msra.mxu0 0.0
    %1534 = vmatprep.subr.mxu0 0.0
    %1535 = vmatpush2.msra.mxu0 0.0
    %1536 = vmatprep.subr.mxu0 0.0
    %1537 = vmatpush2.msra.mxu0 0.0
    %1538 = vmatprep.subr.mxu0 0.0
    %1539 = vmatpush2.msra.mxu0 0.0
    %1540 = vmatprep.subr.mxu0 0.0
    %1541 = vmatpush2.msra.mxu0 0.0
    %1542 = vmatprep.subr.mxu0 0.0
    %1543 = vmatpush2.msra.mxu0 0.0
    %1544 = vmatprep.subr.mxu0 0.0
    %1545 = vmatpush2.msra.mxu0 0.0
    %1546 = vmatprep.subr.mxu0 0.0
    %1547 = vmatpush2.msra.mxu0 0.0
    %1548 = vmatprep.mubr.f32.mxu0 0.0
    %1549 = vmatmul.mubr.f32.gmra.mxu0 %v1482
    %v1550 = vpop.f32.mrf.mxu0
    %v1551 = vadd.f32 0.0, %v1550
    %v1552 = vpop.f32.mrf.mxu0
    %1553 = vdwg.mxu0
    %v1554 = vadd.f32 %v1016, %v1551
    %v1555 = vmax.f32 %v1554, 0.0
    %1556 = vst.msk [vmem:[#allocation2 + $0x30] sm:$0xff] %vm265, %v1555
    %v1558 = vsel %vm265, %v1555, 0
    %1560 = vmatprep.subr.mxu0 0.0
    %1561 = vmatpush1.msra.mxu0 0.0
    %1562 = vmatprep.subr.mxu0 0.0
    %1563 = vmatpush1.msra.mxu0 0.0
    %1564 = vmatprep.subr.mxu0 0.0
    %1565 = vmatpush1.msra.mxu0 0.0
    %1566 = vmatprep.subr.mxu0 0.0
    %1567 = vmatpush1.msra.mxu0 0.0
    %1568 = vmatprep.subr.mxu0 0.0
    %1569 = vmatpush1.msra.mxu0 0.0
    %1570 = vmatprep.subr.mxu0 0.0
    %1571 = vmatpush1.msra.mxu0 0.0
    %1572 = vmatprep.subr.mxu0 0.0
    %1573 = vmatpush1.msra.mxu0 0.0
    %1574 = vmatprep.subr.mxu0 0.0
    %1575 = vmatpush1.msra.mxu0 0.0
    %1576 = vmatprep.subr.mxu0 0.0
    %1577 = vmatpush1.msra.mxu0 0.0
    %1578 = vmatprep.subr.mxu0 0.0
    %1579 = vmatpush1.msra.mxu0 0.0
    %1580 = vmatprep.subr.mxu0 0.0
    %1581 = vmatpush1.msra.mxu0 0.0
    %1582 = vmatprep.subr.mxu0 0.0
    %1583 = vmatpush1.msra.mxu0 0.0
    %1584 = vmatprep.subr.mxu0 0.0
    %1585 = vmatpush1.msra.mxu0 %v1027
    %1586 = vmatprep.subr.mxu0 0.0
    %1587 = vmatpush1.msra.mxu0 %v1026
    %1588 = vmatprep.subr.mxu0 0.0
    %1589 = vmatpush1.msra.mxu0 %v1025
    %1590 = vmatprep.subr.mxu0 0.0
    %1591 = vmatpush1.msra.mxu0 %v1024
    %1592 = vmatprep.subr.mxu0 0.0
    %1593 = vmatpush2.msra.mxu0 0.0
    %1594 = vmatprep.subr.mxu0 0.0
    %1595 = vmatpush2.msra.mxu0 0.0
    %1596 = vmatprep.subr.mxu0 0.0
    %1597 = vmatpush2.msra.mxu0 0.0
    %1598 = vmatprep.subr.mxu0 0.0
    %1599 = vmatpush2.msra.mxu0 0.0
    %1600 = vmatprep.subr.mxu0 0.0
    %1601 = vmatpush2.msra.mxu0 0.0
    %1602 = vmatprep.subr.mxu0 0.0
    %1603 = vmatpush2.msra.mxu0 0.0
    %1604 = vmatprep.subr.mxu0 0.0
    %1605 = vmatpush2.msra.mxu0 0.0
    %1606 = vmatprep.subr.mxu0 0.0
    %1607 = vmatpush2.msra.mxu0 0.0
    %1608 = vmatprep.subr.mxu0 0.0
    %1609 = vmatpush2.msra.mxu0 0.0
    %1610 = vmatprep.subr.mxu0 0.0
    %1611 = vmatpush2.msra.mxu0 0.0
    %1612 = vmatprep.subr.mxu0 0.0
    %1613 = vmatpush2.msra.mxu0 0.0
    %1614 = vmatprep.subr.mxu0 0.0
    %1615 = vmatpush2.msra.mxu0 0.0
    %1616 = vmatprep.subr.mxu0 0.0
    %1617 = vmatpush2.msra.mxu0 0.0
    %1618 = vmatprep.subr.mxu0 0.0
    %1619 = vmatpush2.msra.mxu0 0.0
    %1620 = vmatprep.subr.mxu0 0.0
    %1621 = vmatpush2.msra.mxu0 0.0
    %1622 = vmatprep.subr.mxu0 0.0
    %1623 = vmatpush2.msra.mxu0 0.0
    %1624 = vmatprep.mubr.f32.mxu0 0.0
    %1625 = vmatmul.mubr.f32.gmra.mxu0 %v1558
    %v1626 = vpop.f32.mrf.mxu0
    %v1627 = vadd.f32 0.0, %v1626
    %v1628 = vpop.f32.mrf.mxu0
    %1629 = vdwg.mxu0
    %v1630 = vadd.f32 %v1021, %v1627
    %v1631 = vmax.f32 %v1630, 0.0
    %1632 = vst.msk [vmem:[#allocation2 + $0x38] sm:$0xff] %vm265, %v1631
    %s1633 = scalar_lea.vmem [#allocation14], 2
    %1634 = vst.msk [vmem:[%s1633] sm:$0x3] %vm874, %v1631
    %v1635 = vld [vmem:[#allocation2] sm:$0xff]
    %v1636 = vld [vmem:[#allocation2 + $0x8] sm:$0xff]
    %v1637 = vld [vmem:[#allocation2 + $0x10] sm:$0xff]
    %v1638 = vld [vmem:[#allocation2 + $0x18] sm:$0xff]
    %v1639 = vld [vmem:[#allocation2 + $0x20] sm:$0xff]
    %v1640 = vld [vmem:[#allocation2 + $0x28] sm:$0xff]
    %v1641 = vld [vmem:[#allocation2 + $0x30] sm:$0xff]
    %v1642 = vld [vmem:[#allocation2 + $0x38] sm:$0xff]
    %v1643 = vld [vmem:[%s7] sm:$0xff]
    %v1644 = vld [vmem:[%s7 + $0x8] sm:$0xff]
    %v1645 = vld [vmem:[%s7 + $0x10] sm:$0xff]
    %v1646 = vld [vmem:[%s7 + $0x18] sm:$0xff]
    %v1647 = vld [vmem:[#allocation12] sm:$0x1]
    %v1649 = vlaneseq
    %v1650 = vshrl.u32 %v1649, 7
    %v1651 = vsub.s32 0, %v1650
    %v1652 = vrot.slane %v1647, %v1651
    %v1655 = vsel %vm265, %v1635, 0
    %v1658 = vsel %vm265, %v1636, 0
    %v1661 = vsel %vm265, %v1637, 0
    %v1664 = vsel %vm265, %v1638, 0
    %v1667 = vsel %vm265, %v1639, 0
    %v1670 = vsel %vm265, %v1640, 0
    %v1673 = vsel %vm265, %v1641, 0
    %v1676 = vsel %vm265, %v1642, 0
    %1678 = vmatprep.subr.mxu0 0.0
    %1679 = vmatpush1.msra.mxu0 0.0
    %1680 = vmatprep.subr.mxu0 0.0
    %1681 = vmatpush1.msra.mxu0 0.0
    %1682 = vmatprep.subr.mxu0 0.0
    %1683 = vmatpush1.msra.mxu0 0.0
    %1684 = vmatprep.subr.mxu0 0.0
    %1685 = vmatpush1.msra.mxu0 0.0
    %1686 = vmatprep.subr.mxu0 0.0
    %1687 = vmatpush1.msra.mxu0 0.0
    %1688 = vmatprep.subr.mxu0 0.0
    %1689 = vmatpush1.msra.mxu0 0.0
    %1690 = vmatprep.subr.mxu0 0.0
    %1691 = vmatpush1.msra.mxu0 0.0
    %1692 = vmatprep.subr.mxu0 0.0
    %1693 = vmatpush1.msra.mxu0 0.0
    %1694 = vmatprep.subr.mxu0 0.0
    %1695 = vmatpush1.msra.mxu0 0.0
    %1696 = vmatprep.subr.mxu0 0.0
    %1697 = vmatpush1.msra.mxu0 0.0
    %1698 = vmatprep.subr.mxu0 0.0
    %1699 = vmatpush1.msra.mxu0 0.0
    %1700 = vmatprep.subr.mxu0 0.0
    %1701 = vmatpush1.msra.mxu0 0.0
    %1702 = vmatprep.subr.mxu0 0.0
    %1703 = vmatpush1.msra.mxu0 %v1646
    %1704 = vmatprep.subr.mxu0 0.0
    %1705 = vmatpush1.msra.mxu0 %v1645
    %1706 = vmatprep.subr.mxu0 0.0
    %1707 = vmatpush1.msra.mxu0 %v1644
    %1708 = vmatprep.subr.mxu0 0.0
    %1709 = vmatpush1.msra.mxu0 %v1643
    %1710 = vmatprep.subr.mxu0 0.0
    %1711 = vmatpush2.msra.mxu0 0.0
    %1712 = vmatprep.subr.mxu0 0.0
    %1713 = vmatpush2.msra.mxu0 0.0
    %1714 = vmatprep.subr.mxu0 0.0
    %1715 = vmatpush2.msra.mxu0 0.0
    %1716 = vmatprep.subr.mxu0 0.0
    %1717 = vmatpush2.msra.mxu0 0.0
    %1718 = vmatprep.subr.mxu0 0.0
    %1719 = vmatpush2.msra.mxu0 0.0
    %1720 = vmatprep.subr.mxu0 0.0
    %1721 = vmatpush2.msra.mxu0 0.0
    %1722 = vmatprep.subr.mxu0 0.0
    %1723 = vmatpush2.msra.mxu0 0.0
    %1724 = vmatprep.subr.mxu0 0.0
    %1725 = vmatpush2.msra.mxu0 0.0
    %1726 = vmatprep.subr.mxu0 0.0
    %1727 = vmatpush2.msra.mxu0 0.0
    %1728 = vmatprep.subr.mxu0 0.0
    %1729 = vmatpush2.msra.mxu0 0.0
    %1730 = vmatprep.subr.mxu0 0.0
    %1731 = vmatpush2.msra.mxu0 0.0
    %1732 = vmatprep.subr.mxu0 0.0
    %1733 = vmatpush2.msra.mxu0 0.0
    %1734 = vmatprep.subr.mxu0 0.0
    %1735 = vmatpush2.msra.mxu0 0.0
    %1736 = vmatprep.subr.mxu0 0.0
    %1737 = vmatpush2.msra.mxu0 0.0
    %1738 = vmatprep.subr.mxu0 0.0
    %1739 = vmatpush2.msra.mxu0 0.0
    %1740 = vmatprep.subr.mxu0 0.0
    %1741 = vmatpush2.msra.mxu0 0.0
    %1742 = vmatprep.mubr.f32.mxu0 0.0
    %1743 = vmatmul.mubr.f32.gmra.mxu0 %v1655
    %v1744 = vpop.f32.mrf.mxu0
    %v1745 = vadd.f32 %v1652, %v1744
    %v1746 = vpop.f32.mrf.mxu0
    %1747 = vmatprep.mubr.f32.mxu0 0.0
    %1748 = vmatmul.mubr.f32.gmra.mxu0 %v1658
    %v1749 = vpop.f32.mrf.mxu0
    %v1750 = vadd.f32 %v1652, %v1749
    %v1751 = vpop.f32.mrf.mxu0
    %1752 = vmatprep.mubr.f32.mxu0 0.0
    %1753 = vmatmul.mubr.f32.gmra.mxu0 %v1661
    %v1754 = vpop.f32.mrf.mxu0
    %v1755 = vadd.f32 %v1652, %v1754
    %v1756 = vpop.f32.mrf.mxu0
    %1757 = vmatprep.mubr.f32.mxu0 0.0
    %1758 = vmatmul.mubr.f32.gmra.mxu0 %v1664
    %v1759 = vpop.f32.mrf.mxu0
    %v1760 = vadd.f32 %v1652, %v1759
    %v1761 = vpop.f32.mrf.mxu0
    %1762 = vmatprep.mubr.f32.mxu0 0.0
    %1763 = vmatmul.mubr.f32.gmra.mxu0 %v1667
    %v1764 = vpop.f32.mrf.mxu0
    %v1765 = vadd.f32 %v1652, %v1764
    %v1766 = vpop.f32.mrf.mxu0
    %1767 = vmatprep.mubr.f32.mxu0 0.0
    %1768 = vmatmul.mubr.f32.gmra.mxu0 %v1670
    %v1769 = vpop.f32.mrf.mxu0
    %v1770 = vadd.f32 %v1652, %v1769
    %v1771 = vpop.f32.mrf.mxu0
    %1772 = vmatprep.mubr.f32.mxu0 0.0
    %1773 = vmatmul.mubr.f32.gmra.mxu0 %v1673
    %v1774 = vpop.f32.mrf.mxu0
    %v1775 = vadd.f32 %v1652, %v1774
    %v1776 = vpop.f32.mrf.mxu0
    %1777 = vmatprep.mubr.f32.mxu0 0.0
    %1778 = vmatmul.mubr.f32.gmra.mxu0 %v1676
    %v1779 = vpop.f32.mrf.mxu0
    %v1780 = vadd.f32 %v1652, %v1779
    %v1781 = vpop.f32.mrf.mxu0
    %1782 = vdwg.mxu0
    %v1784 = vrot.slane %v1750, 7
    %v1787 = vrot.slane %v1755, 6
    %v1790 = vrot.slane %v1760, 5
    %v1793 = vrot.slane %v1765, 4
    %v1796 = vrot.slane %v1770, 3
    %v1799 = vrot.slane %v1775, 2
    %v1802 = vrot.slane %v1780, 1
    %v1804 = vsel %vm225, %v1745, %v1784
    %v1805 = vsel %vm227, %v1804, %v1787
    %vm1806 = vcmask 1042432
    %v1807 = vsel %vm1806, %v1805, %v1790
    %vm1808 = vcmask 1043456
    %v1809 = vsel %vm1808, %v1807, %v1793
    %vm1810 = vcmask 1044480
    %v1811 = vsel %vm1810, %v1809, %v1796
    %vm1812 = vcmask 1045504
    %v1813 = vsel %vm1812, %v1811, %v1799
    %v1814 = vsel %vm244, %v1813, %v1802
    %vm1815 = vcmask 31744
    %1816 = vst.msk [vmem:[%s9] sm:$0xff] %vm1815, %v1814
    %v1818 = vrot.slane %v1745, 1
    %v1820 = vrot.slane %v1755, 7
    %v1822 = vrot.slane %v1760, 6
    %v1824 = vrot.slane %v1765, 5
    %v1826 = vrot.slane %v1770, 4
    %v1828 = vrot.slane %v1775, 3
    %v1830 = vrot.slane %v1780, 2
    %v1832 = vsel %vm225, %v1818, %v1750
    %v1833 = vsel %vm227, %v1832, %v1820
    %v1834 = vsel %vm1806, %v1833, %v1822
    %v1835 = vsel %vm1808, %v1834, %v1824
    %v1836 = vsel %vm1810, %v1835, %v1826
    %v1837 = vsel %vm1812, %v1836, %v1828
    %v1838 = vsel %vm244, %v1837, %v1830
    %1839 = vst.msk [vmem:[%s9 + $0x8] sm:$0xff] %vm1815, %v1838
    // Predicated region
    $region62: #{forward.1} parent=1 // pred_check
      _
    $region63: #{forward.1} parent=1 // pred_check_branch
      %1841 = sbr.rel (0) target = $region65
    $region64: #{forward.1} parent=1 // pred_region
      _
    $region65: #{forward.1} parent=1 // pred_fallthru
      _
    // Predicated region
    $region66: #{forward.1} parent=1 // pred_check
      _
    $region67: #{forward.1} parent=1 // pred_check_branch
      %1843 = sbr.rel (0) target = $region69
    $region68: #{forward.1} parent=1 // pred_region
      %s1845 = ssub.s32 64, 64
      %1846 = vsyncadd [#allocation5], %s1845
      %s1847 = sshll.u32 [#allocation14], 4
      %s1848 = int_to_ptr.vmem [resolvable:$true] %s1847
      %1853 = dma.vmem_to_hbm [thread:$0]  %s1848, 64, %s10, [#allocation5], 32, 32, 2
    $region69: #{forward.1} parent=1 // pred_fallthru
      _
    // Predicated region
    $region70: #{forward.1} parent=1 // pred_check
      _
    $region71: #{forward.1} parent=1 // pred_check_branch
      %1855 = sbr.rel (0) target = $region73
    $region72: #{forward.1} parent=1 // pred_region
      _
    $region73: #{forward.1} parent=1 // pred_fallthru
      _
    // Predicated region
    $region74: #{forward.1} parent=1 // pred_check
      _
    $region75: #{forward.1} parent=1 // pred_check_branch
      %1857 = sbr.rel (0) target = $region77
    $region76: #{forward.1} parent=1 // pred_region
      %1858 = dma.done [#allocation5], 64
    $region77: #{forward.1} parent=1 // pred_fallthru
      _
    %1859 = vsyncpa [#allocation4], 1
    %1860 = vsyncpa [#allocation7], 1
    %1861 = vsyncpa [#allocation10], 1
    %1862 = vsyncpa [#allocation13], 1
    %1863 = vsyncpa [#allocation5], 1

</llo_original>
